<compile_context>
chip_gen: v6e
topology: v6e:2x2x1
jax: 0.10.0
libtpu: 0.0.40
codegen_flags: <defaults>
</compile_context>

<pallas_src>
import numpy as np
import jax
import jax.numpy as jnp
from jax.experimental import pallas as pl
from jax.experimental.pallas import tpu as pltpu

# ------------------------- configuration -------------------------
NUM_AGENTS = 4
NUM_ITEMS = 8
NUM_IN = NUM_AGENTS * NUM_ITEMS                 # 32
H = 32                                          # hidden units (both branches)
NUM_A_OUT = (NUM_AGENTS + 1) * NUM_ITEMS        # 40
FUSED_H = 2 * H                                 # 64  (alloc | pay) per batch row
LANES = 2 * FUSED_H                             # 128 (two batch rows packed per vreg row)
ALLOC_W = NUM_AGENTS * NUM_ITEMS                # 32
OUT_W = ALLOC_W + NUM_AGENTS                    # 36 per original row: [alloc | final_pay]
LN_EPS = 1e-3
BATCH = 16


# ------------------------- host-side constant matrices -------------------------
def _build_constants():
    na, ni = NUM_AGENTS, NUM_ITEMS
    # LayerNorm: 4 groups of H lanes (alloc0 | pay0 | alloc1 | pay1).
    Gm = np.zeros((LANES, 8), np.float32)          # group-average (cols 4..7 unused)
    Eb = np.zeros((8, LANES), np.float32)          # group broadcast (rows 4..7 zero)
    for i in range(LANES):
        Gm[i, i // H] = 1.0 / H
        Eb[i // H, i] = 1.0
    S = np.zeros((LANES, 2 * ni), np.float32)        # softmax denominators   (128,16)
    Pc = np.zeros((LANES, 2 * ALLOC_W), np.float32)  # alloc-lane compaction  (128,64)
    Einv = np.zeros((2 * ni, 2 * ALLOC_W), np.float32)  # 1/denom broadcast   (16,64)
    Gs = np.zeros((2 * ALLOC_W, 2 * na), np.float32)    # matrix_dot sums     (64,8)
    Pp = np.zeros((LANES, 2 * na), np.float32)          # pay-lane compaction (128,8)
    Pa = np.zeros((2 * ALLOC_W, 2 * OUT_W), np.float32)  # alloc -> out       (64,72)
    Pf = np.zeros((2 * na, 2 * OUT_W), np.float32)       # final_pay -> out   (8,72)
    for half in range(2):
        for item in range(ni):
            col = half * ni + item
            for a in range(na + 1):                       # includes dummy agent
                S[half * FUSED_H + a * ni + item, col] = 1.0
            for a in range(na):                           # real agents only
                src = half * FUSED_H + a * ni + item
                dst = half * ALLOC_W + a * ni + item
                Pc[src, dst] = 1.0
                Einv[col, dst] = 1.0
                Gs[dst, half * na + a] = 1.0
        for a in range(na):
            Pp[half * FUSED_H + NUM_A_OUT + a, half * na + a] = 1.0
            Pf[half * na + a, half * OUT_W + ALLOC_W + a] = 1.0
        for j in range(ALLOC_W):
            Pa[half * ALLOC_W + j, half * OUT_W + j] = 1.0
    return tuple(jnp.asarray(m) for m in (Gm, Eb, S, Einv, Pc, Pp, Gs, Pa, Pf))


_CONST_CACHE = None


def _constants():
    global _CONST_CACHE
    if _CONST_CACHE is None:
        _CONST_CACHE = _build_constants()
    return _CONST_CACHE


# ------------------------- the kernel -------------------------
def additive_net_kernel(x_ref, w0_ref, w1_ref, w2_ref, vec_ref,
                        gm_ref, eb_ref, s_ref, einv_ref, pc_ref,
                        pp_ref, gs_ref, pa_ref, pf_ref, out_ref):
    f32 = jnp.float32
    x = x_ref[...]                      # (TB, 64)   two batch rows per vreg row
    V = vec_ref[...]                    # (8, 128)   biases / gammas / betas
    Gm = gm_ref[...]                    # (128, 8)   LN group-average matrix
    Eb = eb_ref[...]                    # (8, 128)   LN group broadcast matrix

    def layer_norm(hh, g, b):
        # Group statistics on the MXU; broadcast back with a tiny expansion matmul
        # so the 2-unit XLU stays free.
        mu = jnp.dot(hh, Gm, preferred_element_type=f32)              # (TB, 8)
        d = hh - jnp.dot(mu, Eb, preferred_element_type=f32)          # (TB, 128)
        var = jnp.dot(d * d, Gm, preferred_element_type=f32)          # (TB, 8)
        rstd = jax.lax.rsqrt(var + LN_EPS)
        return d * jnp.dot(rstd, Eb, preferred_element_type=f32) * g + b

    # Fused (alloc | pay) x (row0 | row1) MLP: Linear -> LN -> tanh (x2) -> Linear.
    h = jnp.dot(x, w0_ref[...], preferred_element_type=f32) + V[0:1, :]
    h = jnp.tanh(layer_norm(h, V[1:2, :], V[2:3, :]))
    h = jnp.dot(h, w1_ref[...], preferred_element_type=f32) + V[3:4, :]
    h = jnp.tanh(layer_norm(h, V[4:5, :], V[5:6, :]))
    o2 = jnp.dot(h, w2_ref[...], preferred_element_type=f32) + V[6:7, :]   # (TB, 128)

    # Softmax over the agent axis (per item, per packed half).  A single per-row
    # shift constant is mathematically exact for softmax; logits are O(1) here so
    # no under/overflow risk.  Group sums and broadcasts run on the MXU.
    e = jnp.exp(o2 - jnp.max(o2, axis=-1, keepdims=True))                  # (TB, 128)
    denom = jnp.dot(e, s_ref[...], preferred_element_type=f32)             # (TB, 16)
    inv = pl.reciprocal(denom, approx=False)                               # EUP
    e_alloc = jnp.dot(e, pc_ref[...], preferred_element_type=f32)          # (TB, 64)
    alloc = e_alloc * jnp.dot(inv, einv_ref[...], preferred_element_type=f32)

    # Payments: sigmoid on the whole 128-lane row (one EUP pass via tanh), then
    # compact the 8 pay lanes with a matmul; matrix_dot via a group-sum matmul.
    sig = 0.5 * (jnp.tanh(0.5 * o2) + 1.0)
    pay = jnp.dot(sig, pp_ref[...], preferred_element_type=f32)            # (TB, 8)
    md = jnp.dot(alloc * x, gs_ref[...], preferred_element_type=f32)       # (TB, 8)
    fpay = pay * md

    # Lane-dense packed store: [alloc row0 | fpay row0 | alloc row1 | fpay row1].
    out_ref[...] = (jnp.dot(alloc, pa_ref[...], preferred_element_type=f32)
                    + jnp.dot(fpay, pf_ref[...], preferred_element_type=f32))


# ------------------------- parameter packing (wrapper side) -------------------------
def pack_params(p):
    """Fuse the two branches and duplicate block-diagonally for the 2-row packing."""
    f32 = jnp.float32
    W0f = jnp.concatenate([p["aw0"], p["pw0"]], axis=1)                    # (32, 64)
    W0p = jnp.zeros((2 * NUM_IN, LANES), f32)
    W0p = W0p.at[:NUM_IN, :FUSED_H].set(W0f).at[NUM_IN:, FUSED_H:].set(W0f)

    W1f = jnp.zeros((FUSED_H, FUSED_H), f32)
    W1f = W1f.at[:H, :H].set(p["aw1"]).at[H:, H:].set(p["pw1"])
    W1p = jnp.zeros((LANES, LANES), f32)
    W1p = W1p.at[:FUSED_H, :FUSED_H].set(W1f).at[FUSED_H:, FUSED_H:].set(W1f)

    W2f = jnp.zeros((FUSED_H, FUSED_H), f32)
    W2f = W2f.at[:H, :NUM_A_OUT].set(p["aw2"])
    W2f = W2f.at[H:, NUM_A_OUT:NUM_A_OUT + NUM_AGENTS].set(p["pw2"])
    W2p = jnp.zeros((LANES, LANES), f32)
    W2p = W2p.at[:FUSED_H, :FUSED_H].set(W2f).at[FUSED_H:, FUSED_H:].set(W2f)

    def dup2(a_vec, p_vec, pad=0):
        pieces = [a_vec.reshape(1, -1), p_vec.reshape(1, -1)]
        if pad:
            pieces.append(jnp.zeros((1, pad), f32))
        row = jnp.concatenate(pieces, axis=1)                # (1, 64)
        return jnp.concatenate([row, row], axis=1)           # (1, 128)

    vecs = jnp.concatenate([
        dup2(p["ab0"], p["pb0"]),
        dup2(p["ag0"], p["pg0"]),
        dup2(p["abt0"], p["pbt0"]),
        dup2(p["ab1"], p["pb1"]),
        dup2(p["ag1"], p["pg1"]),
        dup2(p["abt1"], p["pbt1"]),
        dup2(p["ab2"], p["pb2"], pad=FUSED_H - NUM_A_OUT - NUM_AGENTS),
        jnp.zeros((1, LANES), jnp.float32),
    ], axis=0)                                               # (8, 128)
    return W0p, W1p, W2p, vecs


# ------------------------- tile policy -------------------------
def _pick_tb(nb2):
    """Tile in packed rows.  Collapse tiny batches to one step; keep >=2 'parallel'
    steps for moderate batches (v7x megacore); 512-1024-row tiles for huge B."""
    if nb2 >= 2048:
        for tb in (1024, 512, 256, 128, 64, 32, 16, 8):
            if nb2 % tb == 0:
                return tb
    if nb2 >= 64 and nb2 % 16 == 0:
        return nb2 // 2
    return nb2


# ------------------------- wrapper -------------------------
def additive_net_forward(x, params, tb=None):
    """x: (B, num_agents, num_items) f32.  Returns (alloc, final_pay)."""
    B = x.shape[0]
    x_in = x.reshape(B, NUM_IN).astype(jnp.float32)
    Bp = B if B % 2 == 0 else B + 1
    if Bp != B:
        x_in = jnp.concatenate([x_in, jnp.zeros((1, NUM_IN), jnp.float32)], axis=0)
    nb2 = Bp // 2
    xp = x_in.reshape(nb2, 2 * NUM_IN)     # two batch rows packed per vreg row

    if tb is None:
        tb = _pick_tb(nb2)
    assert nb2 % tb == 0 and (tb == nb2 or tb % 8 == 0)

    W0p, W1p, W2p, vecs = pack_params(params)
    weights = (W0p, W1p, W2p, vecs) + _constants()

    in_specs = [pl.BlockSpec((tb, 2 * NUM_IN), lambda i: (i, 0))]
    in_specs += [pl.BlockSpec(a.shape, lambda i: (0, 0)) for a in weights]
    out_specs = pl.BlockSpec((tb, 2 * OUT_W), lambda i: (i, 0))
    out_shape = jax.ShapeDtypeStruct((nb2, 2 * OUT_W), jnp.float32)

    packed = pl.pallas_call(
        additive_net_kernel,
        grid=(nb2 // tb,),
        in_specs=in_specs,
        out_specs=out_specs,
        out_shape=out_shape,
        compiler_params=pltpu.CompilerParams(
            dimension_semantics=("parallel",)),
    )(xp, *weights)

    flat = packed.reshape(Bp, OUT_W)[:B]
    alloc = flat[:, :ALLOC_W].reshape(B, NUM_AGENTS, NUM_ITEMS)
    final_pay = flat[:, ALLOC_W:]
    return alloc, final_pay


# ------------------------- deterministic param init -------------------------
def xavier_uniform(key, fan_in, fan_out):
    bound = (6.0 / (fan_in + fan_out)) ** 0.5
    # stored as (in, out) so the kernel computes h @ W (== torch's x @ W.T)
    return jax.random.uniform(key, (fan_in, fan_out), jnp.float32, -bound, bound)


def init_params(key):
    ks = jax.random.split(key, 6)
    p = {}
    # allocation branch
    p["aw0"] = xavier_uniform(ks[0], NUM_IN, H)
    p["ab0"] = jnp.zeros((1, H), jnp.float32)
    p["ag0"] = jnp.ones((1, H), jnp.float32)
    p["abt0"] = jnp.zeros((1, H), jnp.float32)
    p["aw1"] = xavier_uniform(ks[1], H, H)
    p["ab1"] = jnp.zeros((1, H), jnp.float32)
    p["ag1"] = jnp.ones((1, H), jnp.float32)
    p["abt1"] = jnp.zeros((1, H), jnp.float32)
    p["aw2"] = xavier_uniform(ks[2], H, NUM_A_OUT)
    p["ab2"] = jnp.zeros((1, NUM_A_OUT), jnp.float32)
    # payment branch
    p["pw0"] = xavier_uniform(ks[3], NUM_IN, H)
    p["pb0"] = jnp.zeros((1, H), jnp.float32)
    p["pg0"] = jnp.ones((1, H), jnp.float32)
    p["pbt0"] = jnp.zeros((1, H), jnp.float32)
    p["pw1"] = xavier_uniform(ks[4], H, H)
    p["pb1"] = jnp.zeros((1, H), jnp.float32)
    p["pg1"] = jnp.ones((1, H), jnp.float32)
    p["pbt1"] = jnp.zeros((1, H), jnp.float32)
    p["pw2"] = xavier_uniform(ks[5], H, NUM_AGENTS)
    p["pb2"] = jnp.zeros((1, NUM_AGENTS), jnp.float32)
    return p


# ------------------------- pure-JAX reference (unfused) -------------------------
def _layernorm_ref(h, g, b):
    mu = jnp.mean(h, axis=-1, keepdims=True)
    var = jnp.mean((h - mu) ** 2, axis=-1, keepdims=True)
    return (h - mu) * jax.lax.rsqrt(var + LN_EPS) * g + b


def reference_forward(x, p):
    B = x.shape[0]
    xi = x.reshape(B, NUM_IN)

    def branch(h, w0, b0, g0, bt0, w1, b1, g1, bt1, w2, b2):
        h = jnp.tanh(_layernorm_ref(h @ w0 + b0, g0, bt0))
        h = jnp.tanh(_layernorm_ref(h @ w1 + b1, g1, bt1))
        return h @ w2 + b2

    logits = branch(xi, p["aw0"], p["ab0"], p["ag0"], p["abt0"],
                    p["aw1"], p["ab1"], p["ag1"], p["abt1"],
                    p["aw2"], p["ab2"])
    alloc_full = jax.nn.softmax(
        logits.reshape(B, NUM_AGENTS + 1, NUM_ITEMS), axis=1)
    alloc = alloc_full[:, :-1, :]

    pay = jax.nn.sigmoid(
        branch(xi, p["pw0"], p["pb0"], p["pg0"], p["pbt0"],
               p["pw1"], p["pb1"], p["pg1"], p["pbt1"],
               p["pw2"], p["pb2"]))
    matrix_dot = jnp.sum(alloc * x, axis=-1)
    return alloc, pay * matrix_dot


# ------------------------- main -------------------------
if __name__ == "__main__":
    key = jax.random.PRNGKey(0)
    k_param, k_x = jax.random.split(key)
    params = init_params(k_param)
    # valuations in [0, 1), like typical auction inputs
    x = jax.random.uniform(k_x, (BATCH, NUM_AGENTS, NUM_ITEMS), jnp.float32)

    alloc, final_pay = additive_net_forward(x, params)
    jax.block_until_ready((alloc, final_pay))

    alloc_ref, fpay_ref = reference_forward(x, params)
    assert alloc.shape == (BATCH, NUM_AGENTS, NUM_ITEMS)
    assert final_pay.shape == (BATCH, NUM_AGENTS)
    assert jnp.allclose(alloc, alloc_ref, atol=2e-5, rtol=2e-5)
    assert jnp.allclose(final_pay, fpay_ref, atol=2e-5, rtol=2e-5)

    print("KERNEL_OK")
</pallas_src>

<mosaic_0001>
module attributes {stable_mosaic.version = 11 : i64} {
  func.func @additive_net_kernel(%arg0: i32, %arg1: memref<8x64xf32, #tpu.memory_space<vmem>>, %arg2: memref<64x128xf32, #tpu.memory_space<vmem>>, %arg3: memref<128x128xf32, #tpu.memory_space<vmem>>, %arg4: memref<128x128xf32, #tpu.memory_space<vmem>>, %arg5: memref<8x128xf32, #tpu.memory_space<vmem>>, %arg6: memref<128x8xf32, #tpu.memory_space<vmem>>, %arg7: memref<8x128xf32, #tpu.memory_space<vmem>>, %arg8: memref<128x16xf32, #tpu.memory_space<vmem>>, %arg9: memref<16x64xf32, #tpu.memory_space<vmem>>, %arg10: memref<128x64xf32, #tpu.memory_space<vmem>>, %arg11: memref<128x8xf32, #tpu.memory_space<vmem>>, %arg12: memref<64x8xf32, #tpu.memory_space<vmem>>, %arg13: memref<64x72xf32, #tpu.memory_space<vmem>>, %arg14: memref<8x72xf32, #tpu.memory_space<vmem>>, %arg15: memref<8x72xf32, #tpu.memory_space<vmem>>) attributes {dimension_semantics = [#tpu.dimension_semantics<parallel>], iteration_bounds = array<i64: 1>, scalar_prefetch = 0 : i64, scratch_operands = 0 : i64, tpu.core_type = #tpu.core_type<tc>, window_params = [{transform_indices = @transform_0, window_bounds = array<i64: 8, 64>}, {pipeline_mode = #tpu.pipeline_mode<synchronous>, transform_indices = @transform_1, window_bounds = array<i64: 64, 128>}, {pipeline_mode = #tpu.pipeline_mode<synchronous>, transform_indices = @transform_2, window_bounds = array<i64: 128, 128>}, {pipeline_mode = #tpu.pipeline_mode<synchronous>, transform_indices = @transform_3, window_bounds = array<i64: 128, 128>}, {pipeline_mode = #tpu.pipeline_mode<synchronous>, transform_indices = @transform_4, window_bounds = array<i64: 8, 128>}, {pipeline_mode = #tpu.pipeline_mode<synchronous>, transform_indices = @transform_5, window_bounds = array<i64: 128, 8>}, {pipeline_mode = #tpu.pipeline_mode<synchronous>, transform_indices = @transform_6, window_bounds = array<i64: 8, 128>}, {pipeline_mode = #tpu.pipeline_mode<synchronous>, transform_indices = @transform_7, window_bounds = array<i64: 128, 16>}, {pipeline_mode = #tpu.pipeline_mode<synchronous>, transform_indices = @transform_8, window_bounds = array<i64: 16, 64>}, {pipeline_mode = #tpu.pipeline_mode<synchronous>, transform_indices = @transform_9, window_bounds = array<i64: 128, 64>}, {pipeline_mode = #tpu.pipeline_mode<synchronous>, transform_indices = @transform_10, window_bounds = array<i64: 128, 8>}, {pipeline_mode = #tpu.pipeline_mode<synchronous>, transform_indices = @transform_11, window_bounds = array<i64: 64, 8>}, {pipeline_mode = #tpu.pipeline_mode<synchronous>, transform_indices = @transform_12, window_bounds = array<i64: 64, 72>}, {pipeline_mode = #tpu.pipeline_mode<synchronous>, transform_indices = @transform_13, window_bounds = array<i64: 8, 72>}, {transform_indices = @transform_14, window_bounds = array<i64: 8, 72>}]} {
    %c0 = arith.constant 0 : index
    %c0_0 = arith.constant 0 : index
    %0 = vector.load %arg1[%c0, %c0_0] : memref<8x64xf32, #tpu.memory_space<vmem>>, vector<8x64xf32>
    %c0_1 = arith.constant 0 : index
    %c0_2 = arith.constant 0 : index
    %1 = vector.load %arg5[%c0_1, %c0_2] : memref<8x128xf32, #tpu.memory_space<vmem>>, vector<8x128xf32>
    %c0_3 = arith.constant 0 : index
    %c0_4 = arith.constant 0 : index
    %2 = vector.load %arg6[%c0_3, %c0_4] : memref<128x8xf32, #tpu.memory_space<vmem>>, vector<128x8xf32>
    %c0_5 = arith.constant 0 : index
    %c0_6 = arith.constant 0 : index
    %3 = vector.load %arg7[%c0_5, %c0_6] : memref<8x128xf32, #tpu.memory_space<vmem>>, vector<8x128xf32>
    %c0_7 = arith.constant 0 : index
    %c0_8 = arith.constant 0 : index
    %4 = vector.load %arg2[%c0_7, %c0_8] : memref<64x128xf32, #tpu.memory_space<vmem>>, vector<64x128xf32>
    %cst = arith.constant dense<0.000000e+00> : vector<8x128xf32>
    %5 = tpu.matmul %0, %4, %cst {dimension_numbers = #tpu.dot_dimension_numbers<[1], [0], [0], [1], [0, 0, 1, 1], [], []>} : vector<8x64xf32>, vector<64x128xf32>, vector<8x128xf32> -> vector<8x128xf32>
    %6 = vector.extract_strided_slice %1 {offsets = [0, 0], sizes = [1, 128], strides = [1, 1]} : vector<8x128xf32> to vector<1x128xf32>
    %7 = vector.broadcast %6 : vector<1x128xf32> to vector<8x128xf32>
    %8 = arith.addf %5, %7 : vector<8x128xf32>
    %9 = vector.extract_strided_slice %1 {offsets = [1, 0], sizes = [1, 128], strides = [1, 1]} : vector<8x128xf32> to vector<1x128xf32>
    %10 = vector.extract_strided_slice %1 {offsets = [2, 0], sizes = [1, 128], strides = [1, 1]} : vector<8x128xf32> to vector<1x128xf32>
    %cst_9 = arith.constant dense<0.000000e+00> : vector<8x8xf32>
    %11 = tpu.matmul %8, %2, %cst_9 {dimension_numbers = #tpu.dot_dimension_numbers<[1], [0], [0], [1], [0, 0, 1, 1], [], []>} : vector<8x128xf32>, vector<128x8xf32>, vector<8x8xf32> -> vector<8x8xf32>
    %cst_10 = arith.constant dense<0.000000e+00> : vector<8x128xf32>
    %12 = tpu.matmul %11, %3, %cst_10 {dimension_numbers = #tpu.dot_dimension_numbers<[1], [0], [0], [1], [0, 0, 1, 1], [], []>} : vector<8x8xf32>, vector<8x128xf32>, vector<8x128xf32> -> vector<8x128xf32>
    %13 = arith.subf %8, %12 : vector<8x128xf32>
    %14 = arith.mulf %13, %13 : vector<8x128xf32>
    %cst_11 = arith.constant dense<0.000000e+00> : vector<8x8xf32>
    %15 = tpu.matmul %14, %2, %cst_11 {dimension_numbers = #tpu.dot_dimension_numbers<[1], [0], [0], [1], [0, 0, 1, 1], [], []>} : vector<8x128xf32>, vector<128x8xf32>, vector<8x8xf32> -> vector<8x8xf32>
    %cst_12 = arith.constant 1.000000e-03 : f32
    %16 = vector.broadcast %cst_12 : f32 to vector<8x8xf32>
    %17 = arith.addf %15, %16 : vector<8x8xf32>
    %18 = math.rsqrt %17 : vector<8x8xf32>
    %cst_13 = arith.constant dense<0.000000e+00> : vector<8x128xf32>
    %19 = tpu.matmul %18, %3, %cst_13 {dimension_numbers = #tpu.dot_dimension_numbers<[1], [0], [0], [1], [0, 0, 1, 1], [], []>} : vector<8x8xf32>, vector<8x128xf32>, vector<8x128xf32> -> vector<8x128xf32>
    %20 = arith.mulf %13, %19 : vector<8x128xf32>
    %21 = vector.broadcast %9 : vector<1x128xf32> to vector<8x128xf32>
    %22 = arith.mulf %20, %21 : vector<8x128xf32>
    %23 = vector.broadcast %10 : vector<1x128xf32> to vector<8x128xf32>
    %24 = arith.addf %22, %23 : vector<8x128xf32>
    %25 = math.tanh %24 : vector<8x128xf32>
    %c0_14 = arith.constant 0 : index
    %c0_15 = arith.constant 0 : index
    %26 = vector.load %arg3[%c0_14, %c0_15] : memref<128x128xf32, #tpu.memory_space<vmem>>, vector<128x128xf32>
    %cst_16 = arith.constant dense<0.000000e+00> : vector<8x128xf32>
    %27 = tpu.matmul %25, %26, %cst_16 {dimension_numbers = #tpu.dot_dimension_numbers<[1], [0], [0], [1], [0, 0, 1, 1], [], []>} : vector<8x128xf32>, vector<128x128xf32>, vector<8x128xf32> -> vector<8x128xf32>
    %28 = vector.extract_strided_slice %1 {offsets = [3, 0], sizes = [1, 128], strides = [1, 1]} : vector<8x128xf32> to vector<1x128xf32>
    %29 = vector.broadcast %28 : vector<1x128xf32> to vector<8x128xf32>
    %30 = arith.addf %27, %29 : vector<8x128xf32>
    %31 = vector.extract_strided_slice %1 {offsets = [4, 0], sizes = [1, 128], strides = [1, 1]} : vector<8x128xf32> to vector<1x128xf32>
    %32 = vector.extract_strided_slice %1 {offsets = [5, 0], sizes = [1, 128], strides = [1, 1]} : vector<8x128xf32> to vector<1x128xf32>
    %cst_17 = arith.constant dense<0.000000e+00> : vector<8x8xf32>
    %33 = tpu.matmul %30, %2, %cst_17 {dimension_numbers = #tpu.dot_dimension_numbers<[1], [0], [0], [1], [0, 0, 1, 1], [], []>} : vector<8x128xf32>, vector<128x8xf32>, vector<8x8xf32> -> vector<8x8xf32>
    %cst_18 = arith.constant dense<0.000000e+00> : vector<8x128xf32>
    %34 = tpu.matmul %33, %3, %cst_18 {dimension_numbers = #tpu.dot_dimension_numbers<[1], [0], [0], [1], [0, 0, 1, 1], [], []>} : vector<8x8xf32>, vector<8x128xf32>, vector<8x128xf32> -> vector<8x128xf32>
    %35 = arith.subf %30, %34 : vector<8x128xf32>
    %36 = arith.mulf %35, %35 : vector<8x128xf32>
    %cst_19 = arith.constant dense<0.000000e+00> : vector<8x8xf32>
    %37 = tpu.matmul %36, %2, %cst_19 {dimension_numbers = #tpu.dot_dimension_numbers<[1], [0], [0], [1], [0, 0, 1, 1], [], []>} : vector<8x128xf32>, vector<128x8xf32>, vector<8x8xf32> -> vector<8x8xf32>
    %cst_20 = arith.constant 1.000000e-03 : f32
    %38 = vector.broadcast %cst_20 : f32 to vector<8x8xf32>
    %39 = arith.addf %37, %38 : vector<8x8xf32>
    %40 = math.rsqrt %39 : vector<8x8xf32>
    %cst_21 = arith.constant dense<0.000000e+00> : vector<8x128xf32>
    %41 = tpu.matmul %40, %3, %cst_21 {dimension_numbers = #tpu.dot_dimension_numbers<[1], [0], [0], [1], [0, 0, 1, 1], [], []>} : vector<8x8xf32>, vector<8x128xf32>, vector<8x128xf32> -> vector<8x128xf32>
    %42 = arith.mulf %35, %41 : vector<8x128xf32>
    %43 = vector.broadcast %31 : vector<1x128xf32> to vector<8x128xf32>
    %44 = arith.mulf %42, %43 : vector<8x128xf32>
    %45 = vector.broadcast %32 : vector<1x128xf32> to vector<8x128xf32>
    %46 = arith.addf %44, %45 : vector<8x128xf32>
    %47 = math.tanh %46 : vector<8x128xf32>
    %c0_22 = arith.constant 0 : index
    %c0_23 = arith.constant 0 : index
    %48 = vector.load %arg4[%c0_22, %c0_23] : memref<128x128xf32, #tpu.memory_space<vmem>>, vector<128x128xf32>
    %cst_24 = arith.constant dense<0.000000e+00> : vector<8x128xf32>
    %49 = tpu.matmul %47, %48, %cst_24 {dimension_numbers = #tpu.dot_dimension_numbers<[1], [0], [0], [1], [0, 0, 1, 1], [], []>} : vector<8x128xf32>, vector<128x128xf32>, vector<8x128xf32> -> vector<8x128xf32>
    %50 = vector.extract_strided_slice %1 {offsets = [6, 0], sizes = [1, 128], strides = [1, 1]} : vector<8x128xf32> to vector<1x128xf32>
    %51 = vector.broadcast %50 : vector<1x128xf32> to vector<8x128xf32>
    %52 = arith.addf %49, %51 : vector<8x128xf32>
    %cst_25 = arith.constant dense<0xFF800000> : vector<8xf32>
    %53 = vector.multi_reduction <maximumf>, %52, %cst_25 [1] : vector<8x128xf32> to vector<8xf32>
    %54 = vector.shape_cast %53 : vector<8xf32> to vector<8x1xf32>
    %55 = vector.broadcast %54 : vector<8x1xf32> to vector<8x128xf32>
    %56 = arith.subf %52, %55 : vector<8x128xf32>
    %57 = math.exp %56 : vector<8x128xf32>
    %c0_26 = arith.constant 0 : index
    %c0_27 = arith.constant 0 : index
    %58 = vector.load %arg8[%c0_26, %c0_27] : memref<128x16xf32, #tpu.memory_space<vmem>>, vector<128x16xf32>
    %cst_28 = arith.constant dense<0.000000e+00> : vector<8x16xf32>
    %59 = tpu.matmul %57, %58, %cst_28 {dimension_numbers = #tpu.dot_dimension_numbers<[1], [0], [0], [1], [0, 0, 1, 1], [], []>} : vector<8x128xf32>, vector<128x16xf32>, vector<8x16xf32> -> vector<8x16xf32>
    %60 = tpu.reciprocal %59 : vector<8x16xf32> -> vector<8x16xf32>
    %c0_29 = arith.constant 0 : index
    %c0_30 = arith.constant 0 : index
    %61 = vector.load %arg10[%c0_29, %c0_30] : memref<128x64xf32, #tpu.memory_space<vmem>>, vector<128x64xf32>
    %cst_31 = arith.constant dense<0.000000e+00> : vector<8x64xf32>
    %62 = tpu.matmul %57, %61, %cst_31 {dimension_numbers = #tpu.dot_dimension_numbers<[1], [0], [0], [1], [0, 0, 1, 1], [], []>} : vector<8x128xf32>, vector<128x64xf32>, vector<8x64xf32> -> vector<8x64xf32>
    %c0_32 = arith.constant 0 : index
    %c0_33 = arith.constant 0 : index
    %63 = vector.load %arg9[%c0_32, %c0_33] : memref<16x64xf32, #tpu.memory_space<vmem>>, vector<16x64xf32>
    %cst_34 = arith.constant dense<0.000000e+00> : vector<8x64xf32>
    %64 = tpu.matmul %60, %63, %cst_34 {dimension_numbers = #tpu.dot_dimension_numbers<[1], [0], [0], [1], [0, 0, 1, 1], [], []>} : vector<8x16xf32>, vector<16x64xf32>, vector<8x64xf32> -> vector<8x64xf32>
    %65 = arith.mulf %62, %64 : vector<8x64xf32>
    %cst_35 = arith.constant 5.000000e-01 : f32
    %66 = vector.broadcast %cst_35 : f32 to vector<8x128xf32>
    %67 = arith.mulf %66, %52 : vector<8x128xf32>
    %68 = math.tanh %67 : vector<8x128xf32>
    %cst_36 = arith.constant 1.000000e+00 : f32
    %69 = vector.broadcast %cst_36 : f32 to vector<8x128xf32>
    %70 = arith.addf %68, %69 : vector<8x128xf32>
    %cst_37 = arith.constant 5.000000e-01 : f32
    %71 = vector.broadcast %cst_37 : f32 to vector<8x128xf32>
    %72 = arith.mulf %71, %70 : vector<8x128xf32>
    %c0_38 = arith.constant 0 : index
    %c0_39 = arith.constant 0 : index
    %73 = vector.load %arg11[%c0_38, %c0_39] : memref<128x8xf32, #tpu.memory_space<vmem>>, vector<128x8xf32>
    %cst_40 = arith.constant dense<0.000000e+00> : vector<8x8xf32>
    %74 = tpu.matmul %72, %73, %cst_40 {dimension_numbers = #tpu.dot_dimension_numbers<[1], [0], [0], [1], [0, 0, 1, 1], [], []>} : vector<8x128xf32>, vector<128x8xf32>, vector<8x8xf32> -> vector<8x8xf32>
    %75 = arith.mulf %65, %0 : vector<8x64xf32>
    %c0_41 = arith.constant 0 : index
    %c0_42 = arith.constant 0 : index
    %76 = vector.load %arg12[%c0_41, %c0_42] : memref<64x8xf32, #tpu.memory_space<vmem>>, vector<64x8xf32>
    %cst_43 = arith.constant dense<0.000000e+00> : vector<8x8xf32>
    %77 = tpu.matmul %75, %76, %cst_43 {dimension_numbers = #tpu.dot_dimension_numbers<[1], [0], [0], [1], [0, 0, 1, 1], [], []>} : vector<8x64xf32>, vector<64x8xf32>, vector<8x8xf32> -> vector<8x8xf32>
    %78 = arith.mulf %74, %77 : vector<8x8xf32>
    %c0_44 = arith.constant 0 : index
    %c0_45 = arith.constant 0 : index
    %79 = vector.load %arg13[%c0_44, %c0_45] : memref<64x72xf32, #tpu.memory_space<vmem>>, vector<64x72xf32>
    %cst_46 = arith.constant dense<0.000000e+00> : vector<8x72xf32>
    %80 = tpu.matmul %65, %79, %cst_46 {dimension_numbers = #tpu.dot_dimension_numbers<[1], [0], [0], [1], [0, 0, 1, 1], [], []>} : vector<8x64xf32>, vector<64x72xf32>, vector<8x72xf32> -> vector<8x72xf32>
    %c0_47 = arith.constant 0 : index
    %c0_48 = arith.constant 0 : index
    %81 = vector.load %arg14[%c0_47, %c0_48] : memref<8x72xf32, #tpu.memory_space<vmem>>, vector<8x72xf32>
    %cst_49 = arith.constant dense<0.000000e+00> : vector<8x72xf32>
    %82 = tpu.matmul %78, %81, %cst_49 {dimension_numbers = #tpu.dot_dimension_numbers<[1], [0], [0], [1], [0, 0, 1, 1], [], []>} : vector<8x8xf32>, vector<8x72xf32>, vector<8x72xf32> -> vector<8x72xf32>
    %83 = arith.addf %80, %82 : vector<8x72xf32>
    %c0_50 = arith.constant 0 : index
    %c0_51 = arith.constant 0 : index
    %84 = vector.load %arg15[%c0_50, %c0_51] : memref<8x72xf32, #tpu.memory_space<vmem>>, vector<8x72xf32>
    tpu.vector_store %arg15[%c0_50, %c0_51], %83 {strides = array<i32>} : memref<8x72xf32, #tpu.memory_space<vmem>>, vector<8x72xf32>,
    return
  }
  func.func @transform_0(%arg0: i32) -> (i32, i32) {
    %c0_i32 = arith.constant 0 : i32
    %c0_i32_0 = arith.constant 0 : i32
    return %arg0, %c0_i32 : i32, i32
  }
  func.func @transform_1(%arg0: i32) -> (i32, i32) {
    %c0_i32 = arith.constant 0 : i32
    %c0_i32_0 = arith.constant 0 : i32
    %c0_i32_1 = arith.constant 0 : i32
    return %c0_i32, %c0_i32_0 : i32, i32
  }
  func.func @transform_2(%arg0: i32) -> (i32, i32) {
    %c0_i32 = arith.constant 0 : i32
    %c0_i32_0 = arith.constant 0 : i32
    %c0_i32_1 = arith.constant 0 : i32
    return %c0_i32, %c0_i32_0 : i32, i32
  }
  func.func @transform_3(%arg0: i32) -> (i32, i32) {
    %c0_i32 = arith.constant 0 : i32
    %c0_i32_0 = arith.constant 0 : i32
    %c0_i32_1 = arith.constant 0 : i32
    return %c0_i32, %c0_i32_0 : i32, i32
  }
  func.func @transform_4(%arg0: i32) -> (i32, i32) {
    %c0_i32 = arith.constant 0 : i32
    %c0_i32_0 = arith.constant 0 : i32
    %c0_i32_1 = arith.constant 0 : i32
    return %c0_i32, %c0_i32_0 : i32, i32
  }
  func.func @transform_5(%arg0: i32) -> (i32, i32) {
    %c0_i32 = arith.constant 0 : i32
    %c0_i32_0 = arith.constant 0 : i32
    %c0_i32_1 = arith.constant 0 : i32
    return %c0_i32, %c0_i32_0 : i32, i32
  }
  func.func @transform_6(%arg0: i32) -> (i32, i32) {
    %c0_i32 = arith.constant 0 : i32
    %c0_i32_0 = arith.constant 0 : i32
    %c0_i32_1 = arith.constant 0 : i32
    return %c0_i32, %c0_i32_0 : i32, i32
  }
  func.func @transform_7(%arg0: i32) -> (i32, i32) {
    %c0_i32 = arith.constant 0 : i32
    %c0_i32_0 = arith.constant 0 : i32
    %c0_i32_1 = arith.constant 0 : i32
    return %c0_i32, %c0_i32_0 : i32, i32
  }
  func.func @transform_8(%arg0: i32) -> (i32, i32) {
    %c0_i32 = arith.constant 0 : i32
    %c0_i32_0 = arith.constant 0 : i32
    %c0_i32_1 = arith.constant 0 : i32
    return %c0_i32, %c0_i32_0 : i32, i32
  }
  func.func @transform_9(%arg0: i32) -> (i32, i32) {
    %c0_i32 = arith.constant 0 : i32
    %c0_i32_0 = arith.constant 0 : i32
    %c0_i32_1 = arith.constant 0 : i32
    return %c0_i32, %c0_i32_0 : i32, i32
  }
  func.func @transform_10(%arg0: i32) -> (i32, i32) {
    %c0_i32 = arith.constant 0 : i32
    %c0_i32_0 = arith.constant 0 : i32
    %c0_i32_1 = arith.constant 0 : i32
    return %c0_i32, %c0_i32_0 : i32, i32
  }
  func.func @transform_11(%arg0: i32) -> (i32, i32) {
    %c0_i32 = arith.constant 0 : i32
    %c0_i32_0 = arith.constant 0 : i32
    %c0_i32_1 = arith.constant 0 : i32
    return %c0_i32, %c0_i32_0 : i32, i32
  }
  func.func @transform_12(%arg0: i32) -> (i32, i32) {
    %c0_i32 = arith.constant 0 : i32
    %c0_i32_0 = arith.constant 0 : i32
    %c0_i32_1 = arith.constant 0 : i32
    return %c0_i32, %c0_i32_0 : i32, i32
  }
  func.func @transform_13(%arg0: i32) -> (i32, i32) {
    %c0_i32 = arith.constant 0 : i32
    %c0_i32_0 = arith.constant 0 : i32
    %c0_i32_1 = arith.constant 0 : i32
    return %c0_i32, %c0_i32_0 : i32, i32
  }
  func.func @transform_14(%arg0: i32) -> (i32, i32) {
    %c0_i32 = arith.constant 0 : i32
    %c0_i32_0 = arith.constant 0 : i32
    return %arg0, %c0_i32 : i32, i32
  }
}

</mosaic_0001>

<llo_original>
// kernel: tpu_custom_call.1
$region0: #{tpu_custom_call.1}
  #allocation0 [shape = 'u32[]', space=smem, size = 0x4, offset = 0x4, fixed_abs, tag = 'smem constant byte address 0x4 - core index']
  #allocation1 [shape = 'u32[144,128]{1,0:T(1,128)}', space=vmem, size = 0x12000, scoped, tag = 'internal scratch']
  %s0 = inlined_call_operand.vmem [shape: f32[8,64], index: 0, kind: input, shape index: {}]
  %s1 = inlined_call_operand.vmem [shape: f32[64,128], index: 1, kind: input, shape index: {}]
  %s2 = inlined_call_operand.vmem [shape: f32[128,128], index: 2, kind: input, shape index: {}]
  %s3 = inlined_call_operand.vmem [shape: f32[128,128], index: 3, kind: input, shape index: {}]
  %s4 = inlined_call_operand.vmem [shape: f32[8,128], index: 4, kind: input, shape index: {}]
  %s5 = inlined_call_operand.vmem [shape: f32[128,8], index: 5, kind: input, shape index: {}]
  %s6 = inlined_call_operand.vmem [shape: f32[8,128], index: 6, kind: input, shape index: {}]
  %s7 = inlined_call_operand.vmem [shape: f32[128,16], index: 7, kind: input, shape index: {}]
  %s8 = inlined_call_operand.vmem [shape: f32[16,64], index: 8, kind: input, shape index: {}]
  %s9 = inlined_call_operand.vmem [shape: f32[128,64], index: 9, kind: input, shape index: {}]
  %s10 = inlined_call_operand.vmem [shape: f32[128,8], index: 10, kind: input, shape index: {}]
  %s11 = inlined_call_operand.vmem [shape: f32[64,8], index: 11, kind: input, shape index: {}]
  %s12 = inlined_call_operand.vmem [shape: f32[64,72], index: 12, kind: input, shape index: {}]
  %s13 = inlined_call_operand.vmem [shape: f32[8,72], index: 13, kind: input, shape index: {}]
  %s14 = inlined_call_operand.hbm [shape: f32[8,72], index: 14, kind: output, shape index: {}]
  %s15 = sld [smem:[#allocation0]]
  $region66: #{tpu_custom_call.1} parent=0
    _
  %s17 = ssub.s32 1, %s15
  %s18 = scalar_select 0, %s17, %s15
  $region1: #{tpu_custom_call.1} parent=0
    #allocation2 [shape = 'u8[4096]{0}', space=vmem, size = 0x1000, scoped, tag = 'output window, operand 0, single buffered']
    #allocation3 [shape = 's32[1]{0}', space=sflag, size = 0x4, scoped, tag = 'scoped memory for tpu_custom_call.1']
    %19 = vsyncpa [#allocation3], 0
    // Predicated region
    $region2: #{tpu_custom_call.1} parent=1 // pred_check
      _
    $region3: #{tpu_custom_call.1} parent=1 // pred_check_branch
      %21 = sbr.rel (0) target = $region5
    $region4: #{tpu_custom_call.1} parent=1 // pred_region
      _
    $region5: #{tpu_custom_call.1} parent=1 // pred_fallthru
      _
    // Predicated region
    $region6: #{tpu_custom_call.1} parent=1 // pred_check
      _
    $region7: #{tpu_custom_call.1} parent=1 // pred_check_branch
      %23 = sbr.rel (0) target = $region9
    $region8: #{tpu_custom_call.1} parent=1 // pred_region
      _
    $region9: #{tpu_custom_call.1} parent=1 // pred_fallthru
      _
    // Predicated region
    $region10: #{tpu_custom_call.1} parent=1 // pred_check
      _
    $region11: #{tpu_custom_call.1} parent=1 // pred_check_branch
      %25 = sbr.rel (0) target = $region13
    $region12: #{tpu_custom_call.1} parent=1 // pred_region
      _
    $region13: #{tpu_custom_call.1} parent=1 // pred_fallthru
      _
    // Predicated region
    $region14: #{tpu_custom_call.1} parent=1 // pred_check
      _
    $region15: #{tpu_custom_call.1} parent=1 // pred_check_branch
      %27 = sbr.rel (0) target = $region17
    $region16: #{tpu_custom_call.1} parent=1 // pred_region
      _
    $region17: #{tpu_custom_call.1} parent=1 // pred_fallthru
      _
    // Predicated region
    $region18: #{tpu_custom_call.1} parent=1 // pred_check
      _
    $region19: #{tpu_custom_call.1} parent=1 // pred_check_branch
      %29 = sbr.rel (0) target = $region21
    $region20: #{tpu_custom_call.1} parent=1 // pred_region
      _
    $region21: #{tpu_custom_call.1} parent=1 // pred_fallthru
      _
    // Predicated region
    $region22: #{tpu_custom_call.1} parent=1 // pred_check
      _
    $region23: #{tpu_custom_call.1} parent=1 // pred_check_branch
      %31 = sbr.rel (0) target = $region25
    $region24: #{tpu_custom_call.1} parent=1 // pred_region
      _
    $region25: #{tpu_custom_call.1} parent=1 // pred_fallthru
      _
    // Predicated region
    $region26: #{tpu_custom_call.1} parent=1 // pred_check
      _
    $region27: #{tpu_custom_call.1} parent=1 // pred_check_branch
      %33 = sbr.rel (0) target = $region29
    $region28: #{tpu_custom_call.1} parent=1 // pred_region
      _
    $region29: #{tpu_custom_call.1} parent=1 // pred_fallthru
      _
    // Predicated region
    $region30: #{tpu_custom_call.1} parent=1 // pred_check
      _
    $region31: #{tpu_custom_call.1} parent=1 // pred_check_branch
      %35 = sbr.rel (0) target = $region33
    $region32: #{tpu_custom_call.1} parent=1 // pred_region
      _
    $region33: #{tpu_custom_call.1} parent=1 // pred_fallthru
      _
    // Predicated region
    $region34: #{tpu_custom_call.1} parent=1 // pred_check
      _
    $region35: #{tpu_custom_call.1} parent=1 // pred_check_branch
      %37 = sbr.rel (0) target = $region37
    $region36: #{tpu_custom_call.1} parent=1 // pred_region
      _
    $region37: #{tpu_custom_call.1} parent=1 // pred_fallthru
      _
    // Predicated region
    $region38: #{tpu_custom_call.1} parent=1 // pred_check
      _
    $region39: #{tpu_custom_call.1} parent=1 // pred_check_branch
      %39 = sbr.rel (0) target = $region41
    $region40: #{tpu_custom_call.1} parent=1 // pred_region
      _
    $region41: #{tpu_custom_call.1} parent=1 // pred_fallthru
      _
    // Predicated region
    $region42: #{tpu_custom_call.1} parent=1 // pred_check
      _
    $region43: #{tpu_custom_call.1} parent=1 // pred_check_branch
      %41 = sbr.rel (0) target = $region45
    $region44: #{tpu_custom_call.1} parent=1 // pred_region
      _
    $region45: #{tpu_custom_call.1} parent=1 // pred_fallthru
      _
    // Predicated region
    $region46: #{tpu_custom_call.1} parent=1 // pred_check
      _
    $region47: #{tpu_custom_call.1} parent=1 // pred_check_branch
      %43 = sbr.rel (0) target = $region49
    $region48: #{tpu_custom_call.1} parent=1 // pred_region
      _
    $region49: #{tpu_custom_call.1} parent=1 // pred_fallthru
      _
    // Predicated region
    $region50: #{tpu_custom_call.1} parent=1 // pred_check
      _
    $region51: #{tpu_custom_call.1} parent=1 // pred_check_branch
      %45 = sbr.rel (0) target = $region53
    $region52: #{tpu_custom_call.1} parent=1 // pred_region
      _
    $region53: #{tpu_custom_call.1} parent=1 // pred_fallthru
      _
    // Predicated region
    $region54: #{tpu_custom_call.1} parent=1 // pred_check
      _
    $region55: #{tpu_custom_call.1} parent=1 // pred_check_branch
      %47 = sbr.rel (0) target = $region57
    $region56: #{tpu_custom_call.1} parent=1 // pred_region
      _
    $region57: #{tpu_custom_call.1} parent=1 // pred_fallthru
      _
    %v48 = vld [vmem:[%s0] sm:$0xff]
    %v49 = vld [vmem:[%s4] sm:$0xff]
    %v50 = vld [vmem:[%s5] sm:$0xff]
    %v51 = vld [vmem:[%s5 + $0x8] sm:$0xff]
    %v52 = vld [vmem:[%s5 + $0x10] sm:$0xff]
    %v53 = vld [vmem:[%s5 + $0x18] sm:$0xff]
    %v54 = vld [vmem:[%s5 + $0x20] sm:$0xff]
    %v55 = vld [vmem:[%s5 + $0x28] sm:$0xff]
    %v56 = vld [vmem:[%s5 + $0x30] sm:$0xff]
    %v57 = vld [vmem:[%s5 + $0x38] sm:$0xff]
    %v58 = vld [vmem:[%s5 + $0x40] sm:$0xff]
    %v59 = vld [vmem:[%s5 + $0x48] sm:$0xff]
    %v60 = vld [vmem:[%s5 + $0x50] sm:$0xff]
    %v61 = vld [vmem:[%s5 + $0x58] sm:$0xff]
    %v62 = vld [vmem:[%s5 + $0x60] sm:$0xff]
    %v63 = vld [vmem:[%s5 + $0x68] sm:$0xff]
    %v64 = vld [vmem:[%s5 + $0x70] sm:$0xff]
    %v65 = vld [vmem:[%s5 + $0x78] sm:$0xff]
    %v66 = vld [vmem:[%s6] sm:$0xff]
    %v67 = vld [vmem:[%s1] sm:$0xff]
    %v68 = vld [vmem:[%s1 + $0x8] sm:$0xff]
    %v69 = vld [vmem:[%s1 + $0x10] sm:$0xff]
    %v70 = vld [vmem:[%s1 + $0x18] sm:$0xff]
    %v71 = vld [vmem:[%s1 + $0x20] sm:$0xff]
    %v72 = vld [vmem:[%s1 + $0x28] sm:$0xff]
    %v73 = vld [vmem:[%s1 + $0x30] sm:$0xff]
    %v74 = vld [vmem:[%s1 + $0x38] sm:$0xff]
    %v75 = vlaneseq
    %v76 = vshrl.u32 %v75, 7
    %v77 = vsub.s32 0, %v76
    %v78 = vrot.slane %v49, %v77
    %vm79 = vcmask 523264
    %v81 = vsel %vm79, %v48, 0
    %83 = vmatprep.subr.mxu0 0.0
    %84 = vmatpush1.msra.mxu0 0.0
    %85 = vmatprep.subr.mxu0 0.0
    %86 = vmatpush1.msra.mxu0 0.0
    %87 = vmatprep.subr.mxu0 0.0
    %88 = vmatpush1.msra.mxu0 0.0
    %89 = vmatprep.subr.mxu0 0.0
    %90 = vmatpush1.msra.mxu0 0.0
    %91 = vmatprep.subr.mxu0 0.0
    %92 = vmatpush1.msra.mxu0 0.0
    %93 = vmatprep.subr.mxu0 0.0
    %94 = vmatpush1.msra.mxu0 0.0
    %95 = vmatprep.subr.mxu0 0.0
    %96 = vmatpush1.msra.mxu0 0.0
    %97 = vmatprep.subr.mxu0 0.0
    %98 = vmatpush1.msra.mxu0 0.0
    %99 = vmatprep.subr.mxu0 0.0
    %100 = vmatpush1.msra.mxu0 %v74
    %101 = vmatprep.subr.mxu0 0.0
    %102 = vmatpush1.msra.mxu0 %v73
    %103 = vmatprep.subr.mxu0 0.0
    %104 = vmatpush1.msra.mxu0 %v72
    %105 = vmatprep.subr.mxu0 0.0
    %106 = vmatpush1.msra.mxu0 %v71
    %107 = vmatprep.subr.mxu0 0.0
    %108 = vmatpush1.msra.mxu0 %v70
    %109 = vmatprep.subr.mxu0 0.0
    %110 = vmatpush1.msra.mxu0 %v69
    %111 = vmatprep.subr.mxu0 0.0
    %112 = vmatpush1.msra.mxu0 %v68
    %113 = vmatprep.subr.mxu0 0.0
    %114 = vmatpush1.msra.mxu0 %v67
    %115 = vmatprep.subr.mxu0 0.0
    %116 = vmatpush2.msra.mxu0 0.0
    %117 = vmatprep.subr.mxu0 0.0
    %118 = vmatpush2.msra.mxu0 0.0
    %119 = vmatprep.subr.mxu0 0.0
    %120 = vmatpush2.msra.mxu0 0.0
    %121 = vmatprep.subr.mxu0 0.0
    %122 = vmatpush2.msra.mxu0 0.0
    %123 = vmatprep.subr.mxu0 0.0
    %124 = vmatpush2.msra.mxu0 0.0
    %125 = vmatprep.subr.mxu0 0.0
    %126 = vmatpush2.msra.mxu0 0.0
    %127 = vmatprep.subr.mxu0 0.0
    %128 = vmatpush2.msra.mxu0 0.0
    %129 = vmatprep.subr.mxu0 0.0
    %130 = vmatpush2.msra.mxu0 0.0
    %131 = vmatprep.subr.mxu0 0.0
    %132 = vmatpush2.msra.mxu0 0.0
    %133 = vmatprep.subr.mxu0 0.0
    %134 = vmatpush2.msra.mxu0 0.0
    %135 = vmatprep.subr.mxu0 0.0
    %136 = vmatpush2.msra.mxu0 0.0
    %137 = vmatprep.subr.mxu0 0.0
    %138 = vmatpush2.msra.mxu0 0.0
    %139 = vmatprep.subr.mxu0 0.0
    %140 = vmatpush2.msra.mxu0 0.0
    %141 = vmatprep.subr.mxu0 0.0
    %142 = vmatpush2.msra.mxu0 0.0
    %143 = vmatprep.subr.mxu0 0.0
    %144 = vmatpush2.msra.mxu0 0.0
    %145 = vmatprep.subr.mxu0 0.0
    %146 = vmatpush2.msra.mxu0 0.0
    %147 = vmatprep.mubr.f32.mxu0 0.0
    %148 = vmatmul.mubr.f32.gmra.mxu0 %v81
    %v149 = vpop.f32.mrf.mxu0
    %v150 = vadd.f32 %v78, %v149
    %v151 = vpop.f32.mrf.mxu0
    %152 = vdwg.mxu0
    %153 = vmatprep.subr.mxu0 0.0
    %154 = vmatpush1.msra.mxu0 %v65
    %155 = vmatprep.subr.mxu0 0.0
    %156 = vmatpush1.msra.mxu0 %v64
    %157 = vmatprep.subr.mxu0 0.0
    %158 = vmatpush1.msra.mxu0 %v63
    %159 = vmatprep.subr.mxu0 0.0
    %160 = vmatpush1.msra.mxu0 %v62
    %161 = vmatprep.subr.mxu0 0.0
    %162 = vmatpush1.msra.mxu0 %v61
    %163 = vmatprep.subr.mxu0 0.0
    %164 = vmatpush1.msra.mxu0 %v60
    %165 = vmatprep.subr.mxu0 0.0
    %166 = vmatpush1.msra.mxu0 %v59
    %167 = vmatprep.subr.mxu0 0.0
    %168 = vmatpush1.msra.mxu0 %v58
    %169 = vmatprep.subr.mxu0 0.0
    %170 = vmatpush1.msra.mxu0 %v57
    %171 = vmatprep.subr.mxu0 0.0
    %172 = vmatpush1.msra.mxu0 %v56
    %173 = vmatprep.subr.mxu0 0.0
    %174 = vmatpush1.msra.mxu0 %v55
    %175 = vmatprep.subr.mxu0 0.0
    %176 = vmatpush1.msra.mxu0 %v54
    %177 = vmatprep.subr.mxu0 0.0
    %178 = vmatpush1.msra.mxu0 %v53
    %179 = vmatprep.subr.mxu0 0.0
    %180 = vmatpush1.msra.mxu0 %v52
    %181 = vmatprep.subr.mxu0 0.0
    %182 = vmatpush1.msra.mxu0 %v51
    %183 = vmatprep.subr.mxu0 0.0
    %184 = vmatpush1.msra.mxu0 %v50
    %185 = vmatprep.subr.mxu0 0.0
    %186 = vmatpush2.msra.mxu0 0.0
    %187 = vmatprep.subr.mxu0 0.0
    %188 = vmatpush2.msra.mxu0 0.0
    %189 = vmatprep.subr.mxu0 0.0
    %190 = vmatpush2.msra.mxu0 0.0
    %191 = vmatprep.subr.mxu0 0.0
    %192 = vmatpush2.msra.mxu0 0.0
    %193 = vmatprep.subr.mxu0 0.0
    %194 = vmatpush2.msra.mxu0 0.0
    %195 = vmatprep.subr.mxu0 0.0
    %196 = vmatpush2.msra.mxu0 0.0
    %197 = vmatprep.subr.mxu0 0.0
    %198 = vmatpush2.msra.mxu0 0.0
    %199 = vmatprep.subr.mxu0 0.0
    %200 = vmatpush2.msra.mxu0 0.0
    %201 = vmatprep.subr.mxu0 0.0
    %202 = vmatpush2.msra.mxu0 0.0
    %203 = vmatprep.subr.mxu0 0.0
    %204 = vmatpush2.msra.mxu0 0.0
    %205 = vmatprep.subr.mxu0 0.0
    %206 = vmatpush2.msra.mxu0 0.0
    %207 = vmatprep.subr.mxu0 0.0
    %208 = vmatpush2.msra.mxu0 0.0
    %209 = vmatprep.subr.mxu0 0.0
    %210 = vmatpush2.msra.mxu0 0.0
    %211 = vmatprep.subr.mxu0 0.0
    %212 = vmatpush2.msra.mxu0 0.0
    %213 = vmatprep.subr.mxu0 0.0
    %214 = vmatpush2.msra.mxu0 0.0
    %215 = vmatprep.subr.mxu0 0.0
    %216 = vmatpush2.msra.mxu0 0.0
    %217 = vmatprep.mubr.f32.mxu0 0.0
    %218 = vmatmul.mubr.f32.gmra.mxu0 %v150
    %v219 = vpop.f32.mrf.mxu0
    %v220 = vadd.f32 0.0, %v219
    %v221 = vpop.f32.mrf.mxu0
    %222 = vdwg.mxu0
    %vm223 = vcmask 64512
    %v225 = vsel %vm223, %v220, 0
    %227 = vmatprep.subr.mxu0 0.0
    %228 = vmatpush1.msra.mxu0 0.0
    %229 = vmatprep.subr.mxu0 0.0
    %230 = vmatpush1.msra.mxu0 0.0
    %231 = vmatprep.subr.mxu0 0.0
    %232 = vmatpush1.msra.mxu0 0.0
    %233 = vmatprep.subr.mxu0 0.0
    %234 = vmatpush1.msra.mxu0 0.0
    %235 = vmatprep.subr.mxu0 0.0
    %236 = vmatpush1.msra.mxu0 0.0
    %237 = vmatprep.subr.mxu0 0.0
    %238 = vmatpush1.msra.mxu0 0.0
    %239 = vmatprep.subr.mxu0 0.0
    %240 = vmatpush1.msra.mxu0 0.0
    %241 = vmatprep.subr.mxu0 0.0
    %242 = vmatpush1.msra.mxu0 0.0
    %243 = vmatprep.subr.mxu0 0.0
    %244 = vmatpush1.msra.mxu0 0.0
    %245 = vmatprep.subr.mxu0 0.0
    %246 = vmatpush1.msra.mxu0 0.0
    %247 = vmatprep.subr.mxu0 0.0
    %248 = vmatpush1.msra.mxu0 0.0
    %249 = vmatprep.subr.mxu0 0.0
    %250 = vmatpush1.msra.mxu0 0.0
    %251 = vmatprep.subr.mxu0 0.0
    %252 = vmatpush1.msra.mxu0 0.0
    %253 = vmatprep.subr.mxu0 0.0
    %254 = vmatpush1.msra.mxu0 0.0
    %255 = vmatprep.subr.mxu0 0.0
    %256 = vmatpush1.msra.mxu0 0.0
    %257 = vmatprep.subr.mxu0 0.0
    %258 = vmatpush1.msra.mxu0 %v66
    %259 = vmatprep.subr.mxu0 0.0
    %260 = vmatpush2.msra.mxu0 0.0
    %261 = vmatprep.subr.mxu0 0.0
    %262 = vmatpush2.msra.mxu0 0.0
    %263 = vmatprep.subr.mxu0 0.0
    %264 = vmatpush2.msra.mxu0 0.0
    %265 = vmatprep.subr.mxu0 0.0
    %266 = vmatpush2.msra.mxu0 0.0
    %267 = vmatprep.subr.mxu0 0.0
    %268 = vmatpush2.msra.mxu0 0.0
    %269 = vmatprep.subr.mxu0 0.0
    %270 = vmatpush2.msra.mxu0 0.0
    %271 = vmatprep.subr.mxu0 0.0
    %272 = vmatpush2.msra.mxu0 0.0
    %273 = vmatprep.subr.mxu0 0.0
    %274 = vmatpush2.msra.mxu0 0.0
    %275 = vmatprep.subr.mxu0 0.0
    %276 = vmatpush2.msra.mxu0 0.0
    %277 = vmatprep.subr.mxu0 0.0
    %278 = vmatpush2.msra.mxu0 0.0
    %279 = vmatprep.subr.mxu0 0.0
    %280 = vmatpush2.msra.mxu0 0.0
    %281 = vmatprep.subr.mxu0 0.0
    %282 = vmatpush2.msra.mxu0 0.0
    %283 = vmatprep.subr.mxu0 0.0
    %284 = vmatpush2.msra.mxu0 0.0
    %285 = vmatprep.subr.mxu0 0.0
    %286 = vmatpush2.msra.mxu0 0.0
    %287 = vmatprep.subr.mxu0 0.0
    %288 = vmatpush2.msra.mxu0 0.0
    %289 = vmatprep.subr.mxu0 0.0
    %290 = vmatpush2.msra.mxu0 0.0
    %291 = vmatprep.mubr.f32.mxu0 0.0
    %292 = vmatmul.mubr.f32.gmra.mxu0 %v225
    %v293 = vpop.f32.mrf.mxu0
    %v294 = vadd.f32 0.0, %v293
    %v295 = vpop.f32.mrf.mxu0
    %296 = vdwg.mxu0
    %v297 = vsub.f32 %v150, %v294
    %v298 = vmul.f32 %v297, %v297
    %299 = vmatprep.subr.mxu0 0.0
    %300 = vmatpush1.msra.mxu0 %v65
    %301 = vmatprep.subr.mxu0 0.0
    %302 = vmatpush1.msra.mxu0 %v64
    %303 = vmatprep.subr.mxu0 0.0
    %304 = vmatpush1.msra.mxu0 %v63
    %305 = vmatprep.subr.mxu0 0.0
    %306 = vmatpush1.msra.mxu0 %v62
    %307 = vmatprep.subr.mxu0 0.0
    %308 = vmatpush1.msra.mxu0 %v61
    %309 = vmatprep.subr.mxu0 0.0
    %310 = vmatpush1.msra.mxu0 %v60
    %311 = vmatprep.subr.mxu0 0.0
    %312 = vmatpush1.msra.mxu0 %v59
    %313 = vmatprep.subr.mxu0 0.0
    %314 = vmatpush1.msra.mxu0 %v58
    %315 = vmatprep.subr.mxu0 0.0
    %316 = vmatpush1.msra.mxu0 %v57
    %317 = vmatprep.subr.mxu0 0.0
    %318 = vmatpush1.msra.mxu0 %v56
    %319 = vmatprep.subr.mxu0 0.0
    %320 = vmatpush1.msra.mxu0 %v55
    %321 = vmatprep.subr.mxu0 0.0
    %322 = vmatpush1.msra.mxu0 %v54
    %323 = vmatprep.subr.mxu0 0.0
    %324 = vmatpush1.msra.mxu0 %v53
    %325 = vmatprep.subr.mxu0 0.0
    %326 = vmatpush1.msra.mxu0 %v52
    %327 = vmatprep.subr.mxu0 0.0
    %328 = vmatpush1.msra.mxu0 %v51
    %329 = vmatprep.subr.mxu0 0.0
    %330 = vmatpush1.msra.mxu0 %v50
    %331 = vmatprep.subr.mxu0 0.0
    %332 = vmatpush2.msra.mxu0 0.0
    %333 = vmatprep.subr.mxu0 0.0
    %334 = vmatpush2.msra.mxu0 0.0
    %335 = vmatprep.subr.mxu0 0.0
    %336 = vmatpush2.msra.mxu0 0.0
    %337 = vmatprep.subr.mxu0 0.0
    %338 = vmatpush2.msra.mxu0 0.0
    %339 = vmatprep.subr.mxu0 0.0
    %340 = vmatpush2.msra.mxu0 0.0
    %341 = vmatprep.subr.mxu0 0.0
    %342 = vmatpush2.msra.mxu0 0.0
    %343 = vmatprep.subr.mxu0 0.0
    %344 = vmatpush2.msra.mxu0 0.0
    %345 = vmatprep.subr.mxu0 0.0
    %346 = vmatpush2.msra.mxu0 0.0
    %347 = vmatprep.subr.mxu0 0.0
    %348 = vmatpush2.msra.mxu0 0.0
    %349 = vmatprep.subr.mxu0 0.0
    %350 = vmatpush2.msra.mxu0 0.0
    %351 = vmatprep.subr.mxu0 0.0
    %352 = vmatpush2.msra.mxu0 0.0
    %353 = vmatprep.subr.mxu0 0.0
    %354 = vmatpush2.msra.mxu0 0.0
    %355 = vmatprep.subr.mxu0 0.0
    %356 = vmatpush2.msra.mxu0 0.0
    %357 = vmatprep.subr.mxu0 0.0
    %358 = vmatpush2.msra.mxu0 0.0
    %359 = vmatprep.subr.mxu0 0.0
    %360 = vmatpush2.msra.mxu0 0.0
    %361 = vmatprep.subr.mxu0 0.0
    %362 = vmatpush2.msra.mxu0 0.0
    %363 = vmatprep.mubr.f32.mxu0 0.0
    %364 = vmatmul.mubr.f32.gmra.mxu0 %v298
    %v365 = vpop.f32.mrf.mxu0
    %v366 = vadd.f32 0.001, %v365
    %v367 = vpop.f32.mrf.mxu0
    %368 = vdwg.mxu0
    %v369 = vrsqrt.pop %v366
    %v371 = vsel %vm223, %v369, 0
    %373 = vmatprep.subr.mxu0 0.0
    %374 = vmatpush1.msra.mxu0 0.0
    %375 = vmatprep.subr.mxu0 0.0
    %376 = vmatpush1.msra.mxu0 0.0
    %377 = vmatprep.subr.mxu0 0.0
    %378 = vmatpush1.msra.mxu0 0.0
    %379 = vmatprep.subr.mxu0 0.0
    %380 = vmatpush1.msra.mxu0 0.0
    %381 = vmatprep.subr.mxu0 0.0
    %382 = vmatpush1.msra.mxu0 0.0
    %383 = vmatprep.subr.mxu0 0.0
    %384 = vmatpush1.msra.mxu0 0.0
    %385 = vmatprep.subr.mxu0 0.0
    %386 = vmatpush1.msra.mxu0 0.0
    %387 = vmatprep.subr.mxu0 0.0
    %388 = vmatpush1.msra.mxu0 0.0
    %389 = vmatprep.subr.mxu0 0.0
    %390 = vmatpush1.msra.mxu0 0.0
    %391 = vmatprep.subr.mxu0 0.0
    %392 = vmatpush1.msra.mxu0 0.0
    %393 = vmatprep.subr.mxu0 0.0
    %394 = vmatpush1.msra.mxu0 0.0
    %395 = vmatprep.subr.mxu0 0.0
    %396 = vmatpush1.msra.mxu0 0.0
    %397 = vmatprep.subr.mxu0 0.0
    %398 = vmatpush1.msra.mxu0 0.0
    %399 = vmatprep.subr.mxu0 0.0
    %400 = vmatpush1.msra.mxu0 0.0
    %401 = vmatprep.subr.mxu0 0.0
    %402 = vmatpush1.msra.mxu0 0.0
    %403 = vmatprep.subr.mxu0 0.0
    %404 = vmatpush1.msra.mxu0 %v66
    %405 = vmatprep.subr.mxu0 0.0
    %406 = vmatpush2.msra.mxu0 0.0
    %407 = vmatprep.subr.mxu0 0.0
    %408 = vmatpush2.msra.mxu0 0.0
    %409 = vmatprep.subr.mxu0 0.0
    %410 = vmatpush2.msra.mxu0 0.0
    %411 = vmatprep.subr.mxu0 0.0
    %412 = vmatpush2.msra.mxu0 0.0
    %413 = vmatprep.subr.mxu0 0.0
    %414 = vmatpush2.msra.mxu0 0.0
    %415 = vmatprep.subr.mxu0 0.0
    %416 = vmatpush2.msra.mxu0 0.0
    %417 = vmatprep.subr.mxu0 0.0
    %418 = vmatpush2.msra.mxu0 0.0
    %419 = vmatprep.subr.mxu0 0.0
    %420 = vmatpush2.msra.mxu0 0.0
    %421 = vmatprep.subr.mxu0 0.0
    %422 = vmatpush2.msra.mxu0 0.0
    %423 = vmatprep.subr.mxu0 0.0
    %424 = vmatpush2.msra.mxu0 0.0
    %425 = vmatprep.subr.mxu0 0.0
    %426 = vmatpush2.msra.mxu0 0.0
    %427 = vmatprep.subr.mxu0 0.0
    %428 = vmatpush2.msra.mxu0 0.0
    %429 = vmatprep.subr.mxu0 0.0
    %430 = vmatpush2.msra.mxu0 0.0
    %431 = vmatprep.subr.mxu0 0.0
    %432 = vmatpush2.msra.mxu0 0.0
    %433 = vmatprep.subr.mxu0 0.0
    %434 = vmatpush2.msra.mxu0 0.0
    %435 = vmatprep.subr.mxu0 0.0
    %436 = vmatpush2.msra.mxu0 0.0
    %437 = vmatprep.mubr.f32.mxu0 0.0
    %438 = vmatmul.mubr.f32.gmra.mxu0 %v371
    %v439 = vpop.f32.mrf.mxu0
    %v440 = vadd.f32 0.0, %v439
    %v441 = vpop.f32.mrf.mxu0
    %442 = vdwg.mxu0
    %v443 = vmul.f32 %v297, %v440
    %v444 = vlaneseq
    %v445 = vshrl.u32 %v444, 7
    %v446 = vsub.s32 1, %v445
    %v447 = vrot.slane %v49, %v446
    %v448 = vmul.f32 %v443, %v447
    %v449 = vlaneseq
    %v450 = vshrl.u32 %v449, 7
    %v451 = vsub.s32 2, %v450
    %v452 = vrot.slane %v49, %v451
    %v453 = vadd.f32 %v448, %v452
    %v454 = vtanh.pop %v453
    %v455 = vld [vmem:[%s2] sm:$0xff]
    %v456 = vld [vmem:[%s2 + $0x8] sm:$0xff]
    %v457 = vld [vmem:[%s2 + $0x10] sm:$0xff]
    %v458 = vld [vmem:[%s2 + $0x18] sm:$0xff]
    %v459 = vld [vmem:[%s2 + $0x20] sm:$0xff]
    %v460 = vld [vmem:[%s2 + $0x28] sm:$0xff]
    %v461 = vld [vmem:[%s2 + $0x30] sm:$0xff]
    %v462 = vld [vmem:[%s2 + $0x38] sm:$0xff]
    %v463 = vld [vmem:[%s2 + $0x40] sm:$0xff]
    %v464 = vld [vmem:[%s2 + $0x48] sm:$0xff]
    %v465 = vld [vmem:[%s2 + $0x50] sm:$0xff]
    %v466 = vld [vmem:[%s2 + $0x58] sm:$0xff]
    %v467 = vld [vmem:[%s2 + $0x60] sm:$0xff]
    %v468 = vld [vmem:[%s2 + $0x68] sm:$0xff]
    %v469 = vld [vmem:[%s2 + $0x70] sm:$0xff]
    %v470 = vld [vmem:[%s2 + $0x78] sm:$0xff]
    %v471 = vlaneseq
    %v472 = vshrl.u32 %v471, 7
    %v473 = vsub.s32 3, %v472
    %v474 = vrot.slane %v49, %v473
    %475 = vmatprep.subr.mxu0 0.0
    %476 = vmatpush1.msra.mxu0 %v470
    %477 = vmatprep.subr.mxu0 0.0
    %478 = vmatpush1.msra.mxu0 %v469
    %479 = vmatprep.subr.mxu0 0.0
    %480 = vmatpush1.msra.mxu0 %v468
    %481 = vmatprep.subr.mxu0 0.0
    %482 = vmatpush1.msra.mxu0 %v467
    %483 = vmatprep.subr.mxu0 0.0
    %484 = vmatpush1.msra.mxu0 %v466
    %485 = vmatprep.subr.mxu0 0.0
    %486 = vmatpush1.msra.mxu0 %v465
    %487 = vmatprep.subr.mxu0 0.0
    %488 = vmatpush1.msra.mxu0 %v464
    %489 = vmatprep.subr.mxu0 0.0
    %490 = vmatpush1.msra.mxu0 %v463
    %491 = vmatprep.subr.mxu0 0.0
    %492 = vmatpush1.msra.mxu0 %v462
    %493 = vmatprep.subr.mxu0 0.0
    %494 = vmatpush1.msra.mxu0 %v461
    %495 = vmatprep.subr.mxu0 0.0
    %496 = vmatpush1.msra.mxu0 %v460
    %497 = vmatprep.subr.mxu0 0.0
    %498 = vmatpush1.msra.mxu0 %v459
    %499 = vmatprep.subr.mxu0 0.0
    %500 = vmatpush1.msra.mxu0 %v458
    %501 = vmatprep.subr.mxu0 0.0
    %502 = vmatpush1.msra.mxu0 %v457
    %503 = vmatprep.subr.mxu0 0.0
    %504 = vmatpush1.msra.mxu0 %v456
    %505 = vmatprep.subr.mxu0 0.0
    %506 = vmatpush1.msra.mxu0 %v455
    %507 = vmatprep.subr.mxu0 0.0
    %508 = vmatpush2.msra.mxu0 0.0
    %509 = vmatprep.subr.mxu0 0.0
    %510 = vmatpush2.msra.mxu0 0.0
    %511 = vmatprep.subr.mxu0 0.0
    %512 = vmatpush2.msra.mxu0 0.0
    %513 = vmatprep.subr.mxu0 0.0
    %514 = vmatpush2.msra.mxu0 0.0
    %515 = vmatprep.subr.mxu0 0.0
    %516 = vmatpush2.msra.mxu0 0.0
    %517 = vmatprep.subr.mxu0 0.0
    %518 = vmatpush2.msra.mxu0 0.0
    %519 = vmatprep.subr.mxu0 0.0
    %520 = vmatpush2.msra.mxu0 0.0
    %521 = vmatprep.subr.mxu0 0.0
    %522 = vmatpush2.msra.mxu0 0.0
    %523 = vmatprep.subr.mxu0 0.0
    %524 = vmatpush2.msra.mxu0 0.0
    %525 = vmatprep.subr.mxu0 0.0
    %526 = vmatpush2.msra.mxu0 0.0
    %527 = vmatprep.subr.mxu0 0.0
    %528 = vmatpush2.msra.mxu0 0.0
    %529 = vmatprep.subr.mxu0 0.0
    %530 = vmatpush2.msra.mxu0 0.0
    %531 = vmatprep.subr.mxu0 0.0
    %532 = vmatpush2.msra.mxu0 0.0
    %533 = vmatprep.subr.mxu0 0.0
    %534 = vmatpush2.msra.mxu0 0.0
    %535 = vmatprep.subr.mxu0 0.0
    %536 = vmatpush2.msra.mxu0 0.0
    %537 = vmatprep.subr.mxu0 0.0
    %538 = vmatpush2.msra.mxu0 0.0
    %539 = vmatprep.mubr.f32.mxu0 0.0
    %540 = vmatmul.mubr.f32.gmra.mxu0 %v454
    %v541 = vpop.f32.mrf.mxu0
    %v542 = vadd.f32 %v474, %v541
    %v543 = vpop.f32.mrf.mxu0
    %544 = vdwg.mxu0
    %545 = vmatprep.subr.mxu0 0.0
    %546 = vmatpush1.msra.mxu0 %v65
    %547 = vmatprep.subr.mxu0 0.0
    %548 = vmatpush1.msra.mxu0 %v64
    %549 = vmatprep.subr.mxu0 0.0
    %550 = vmatpush1.msra.mxu0 %v63
    %551 = vmatprep.subr.mxu0 0.0
    %552 = vmatpush1.msra.mxu0 %v62
    %553 = vmatprep.subr.mxu0 0.0
    %554 = vmatpush1.msra.mxu0 %v61
    %555 = vmatprep.subr.mxu0 0.0
    %556 = vmatpush1.msra.mxu0 %v60
    %557 = vmatprep.subr.mxu0 0.0
    %558 = vmatpush1.msra.mxu0 %v59
    %559 = vmatprep.subr.mxu0 0.0
    %560 = vmatpush1.msra.mxu0 %v58
    %561 = vmatprep.subr.mxu0 0.0
    %562 = vmatpush1.msra.mxu0 %v57
    %563 = vmatprep.subr.mxu0 0.0
    %564 = vmatpush1.msra.mxu0 %v56
    %565 = vmatprep.subr.mxu0 0.0
    %566 = vmatpush1.msra.mxu0 %v55
    %567 = vmatprep.subr.mxu0 0.0
    %568 = vmatpush1.msra.mxu0 %v54
    %569 = vmatprep.subr.mxu0 0.0
    %570 = vmatpush1.msra.mxu0 %v53
    %571 = vmatprep.subr.mxu0 0.0
    %572 = vmatpush1.msra.mxu0 %v52
    %573 = vmatprep.subr.mxu0 0.0
    %574 = vmatpush1.msra.mxu0 %v51
    %575 = vmatprep.subr.mxu0 0.0
    %576 = vmatpush1.msra.mxu0 %v50
    %577 = vmatprep.subr.mxu0 0.0
    %578 = vmatpush2.msra.mxu0 0.0
    %579 = vmatprep.subr.mxu0 0.0
    %580 = vmatpush2.msra.mxu0 0.0
    %581 = vmatprep.subr.mxu0 0.0
    %582 = vmatpush2.msra.mxu0 0.0
    %583 = vmatprep.subr.mxu0 0.0
    %584 = vmatpush2.msra.mxu0 0.0
    %585 = vmatprep.subr.mxu0 0.0
    %586 = vmatpush2.msra.mxu0 0.0
    %587 = vmatprep.subr.mxu0 0.0
    %588 = vmatpush2.msra.mxu0 0.0
    %589 = vmatprep.subr.mxu0 0.0
    %590 = vmatpush2.msra.mxu0 0.0
    %591 = vmatprep.subr.mxu0 0.0
    %592 = vmatpush2.msra.mxu0 0.0
    %593 = vmatprep.subr.mxu0 0.0
    %594 = vmatpush2.msra.mxu0 0.0
    %595 = vmatprep.subr.mxu0 0.0
    %596 = vmatpush2.msra.mxu0 0.0
    %597 = vmatprep.subr.mxu0 0.0
    %598 = vmatpush2.msra.mxu0 0.0
    %599 = vmatprep.subr.mxu0 0.0
    %600 = vmatpush2.msra.mxu0 0.0
    %601 = vmatprep.subr.mxu0 0.0
    %602 = vmatpush2.msra.mxu0 0.0
    %603 = vmatprep.subr.mxu0 0.0
    %604 = vmatpush2.msra.mxu0 0.0
    %605 = vmatprep.subr.mxu0 0.0
    %606 = vmatpush2.msra.mxu0 0.0
    %607 = vmatprep.subr.mxu0 0.0
    %608 = vmatpush2.msra.mxu0 0.0
    %609 = vmatprep.mubr.f32.mxu0 0.0
    %610 = vmatmul.mubr.f32.gmra.mxu0 %v542
    %v611 = vpop.f32.mrf.mxu0
    %v612 = vadd.f32 0.0, %v611
    %v613 = vpop.f32.mrf.mxu0
    %614 = vdwg.mxu0
    %v616 = vsel %vm223, %v612, 0
    %618 = vmatprep.subr.mxu0 0.0
    %619 = vmatpush1.msra.mxu0 0.0
    %620 = vmatprep.subr.mxu0 0.0
    %621 = vmatpush1.msra.mxu0 0.0
    %622 = vmatprep.subr.mxu0 0.0
    %623 = vmatpush1.msra.mxu0 0.0
    %624 = vmatprep.subr.mxu0 0.0
    %625 = vmatpush1.msra.mxu0 0.0
    %626 = vmatprep.subr.mxu0 0.0
    %627 = vmatpush1.msra.mxu0 0.0
    %628 = vmatprep.subr.mxu0 0.0
    %629 = vmatpush1.msra.mxu0 0.0
    %630 = vmatprep.subr.mxu0 0.0
    %631 = vmatpush1.msra.mxu0 0.0
    %632 = vmatprep.subr.mxu0 0.0
    %633 = vmatpush1.msra.mxu0 0.0
    %634 = vmatprep.subr.mxu0 0.0
    %635 = vmatpush1.msra.mxu0 0.0
    %636 = vmatprep.subr.mxu0 0.0
    %637 = vmatpush1.msra.mxu0 0.0
    %638 = vmatprep.subr.mxu0 0.0
    %639 = vmatpush1.msra.mxu0 0.0
    %640 = vmatprep.subr.mxu0 0.0
    %641 = vmatpush1.msra.mxu0 0.0
    %642 = vmatprep.subr.mxu0 0.0
    %643 = vmatpush1.msra.mxu0 0.0
    %644 = vmatprep.subr.mxu0 0.0
    %645 = vmatpush1.msra.mxu0 0.0
    %646 = vmatprep.subr.mxu0 0.0
    %647 = vmatpush1.msra.mxu0 0.0
    %648 = vmatprep.subr.mxu0 0.0
    %649 = vmatpush1.msra.mxu0 %v66
    %650 = vmatprep.subr.mxu0 0.0
    %651 = vmatpush2.msra.mxu0 0.0
    %652 = vmatprep.subr.mxu0 0.0
    %653 = vmatpush2.msra.mxu0 0.0
    %654 = vmatprep.subr.mxu0 0.0
    %655 = vmatpush2.msra.mxu0 0.0
    %656 = vmatprep.subr.mxu0 0.0
    %657 = vmatpush2.msra.mxu0 0.0
    %658 = vmatprep.subr.mxu0 0.0
    %659 = vmatpush2.msra.mxu0 0.0
    %660 = vmatprep.subr.mxu0 0.0
    %661 = vmatpush2.msra.mxu0 0.0
    %662 = vmatprep.subr.mxu0 0.0
    %663 = vmatpush2.msra.mxu0 0.0
    %664 = vmatprep.subr.mxu0 0.0
    %665 = vmatpush2.msra.mxu0 0.0
    %666 = vmatprep.subr.mxu0 0.0
    %667 = vmatpush2.msra.mxu0 0.0
    %668 = vmatprep.subr.mxu0 0.0
    %669 = vmatpush2.msra.mxu0 0.0
    %670 = vmatprep.subr.mxu0 0.0
    %671 = vmatpush2.msra.mxu0 0.0
    %672 = vmatprep.subr.mxu0 0.0
    %673 = vmatpush2.msra.mxu0 0.0
    %674 = vmatprep.subr.mxu0 0.0
    %675 = vmatpush2.msra.mxu0 0.0
    %676 = vmatprep.subr.mxu0 0.0
    %677 = vmatpush2.msra.mxu0 0.0
    %678 = vmatprep.subr.mxu0 0.0
    %679 = vmatpush2.msra.mxu0 0.0
    %680 = vmatprep.subr.mxu0 0.0
    %681 = vmatpush2.msra.mxu0 0.0
    %682 = vmatprep.mubr.f32.mxu0 0.0
    %683 = vmatmul.mubr.f32.gmra.mxu0 %v616
    %v684 = vpop.f32.mrf.mxu0
    %v685 = vadd.f32 0.0, %v684
    %v686 = vpop.f32.mrf.mxu0
    %687 = vdwg.mxu0
    %v688 = vsub.f32 %v542, %v685
    %v689 = vmul.f32 %v688, %v688
    %690 = vmatprep.subr.mxu0 0.0
    %691 = vmatpush1.msra.mxu0 %v65
    %692 = vmatprep.subr.mxu0 0.0
    %693 = vmatpush1.msra.mxu0 %v64
    %694 = vmatprep.subr.mxu0 0.0
    %695 = vmatpush1.msra.mxu0 %v63
    %696 = vmatprep.subr.mxu0 0.0
    %697 = vmatpush1.msra.mxu0 %v62
    %698 = vmatprep.subr.mxu0 0.0
    %699 = vmatpush1.msra.mxu0 %v61
    %700 = vmatprep.subr.mxu0 0.0
    %701 = vmatpush1.msra.mxu0 %v60
    %702 = vmatprep.subr.mxu0 0.0
    %703 = vmatpush1.msra.mxu0 %v59
    %704 = vmatprep.subr.mxu0 0.0
    %705 = vmatpush1.msra.mxu0 %v58
    %706 = vmatprep.subr.mxu0 0.0
    %707 = vmatpush1.msra.mxu0 %v57
    %708 = vmatprep.subr.mxu0 0.0
    %709 = vmatpush1.msra.mxu0 %v56
    %710 = vmatprep.subr.mxu0 0.0
    %711 = vmatpush1.msra.mxu0 %v55
    %712 = vmatprep.subr.mxu0 0.0
    %713 = vmatpush1.msra.mxu0 %v54
    %714 = vmatprep.subr.mxu0 0.0
    %715 = vmatpush1.msra.mxu0 %v53
    %716 = vmatprep.subr.mxu0 0.0
    %717 = vmatpush1.msra.mxu0 %v52
    %718 = vmatprep.subr.mxu0 0.0
    %719 = vmatpush1.msra.mxu0 %v51
    %720 = vmatprep.subr.mxu0 0.0
    %721 = vmatpush1.msra.mxu0 %v50
    %722 = vmatprep.subr.mxu0 0.0
    %723 = vmatpush2.msra.mxu0 0.0
    %724 = vmatprep.subr.mxu0 0.0
    %725 = vmatpush2.msra.mxu0 0.0
    %726 = vmatprep.subr.mxu0 0.0
    %727 = vmatpush2.msra.mxu0 0.0
    %728 = vmatprep.subr.mxu0 0.0
    %729 = vmatpush2.msra.mxu0 0.0
    %730 = vmatprep.subr.mxu0 0.0
    %731 = vmatpush2.msra.mxu0 0.0
    %732 = vmatprep.subr.mxu0 0.0
    %733 = vmatpush2.msra.mxu0 0.0
    %734 = vmatprep.subr.mxu0 0.0
    %735 = vmatpush2.msra.mxu0 0.0
    %736 = vmatprep.subr.mxu0 0.0
    %737 = vmatpush2.msra.mxu0 0.0
    %738 = vmatprep.subr.mxu0 0.0
    %739 = vmatpush2.msra.mxu0 0.0
    %740 = vmatprep.subr.mxu0 0.0
    %741 = vmatpush2.msra.mxu0 0.0
    %742 = vmatprep.subr.mxu0 0.0
    %743 = vmatpush2.msra.mxu0 0.0
    %744 = vmatprep.subr.mxu0 0.0
    %745 = vmatpush2.msra.mxu0 0.0
    %746 = vmatprep.subr.mxu0 0.0
    %747 = vmatpush2.msra.mxu0 0.0
    %748 = vmatprep.subr.mxu0 0.0
    %749 = vmatpush2.msra.mxu0 0.0
    %750 = vmatprep.subr.mxu0 0.0
    %751 = vmatpush2.msra.mxu0 0.0
    %752 = vmatprep.subr.mxu0 0.0
    %753 = vmatpush2.msra.mxu0 0.0
    %754 = vmatprep.mubr.f32.mxu0 0.0
    %755 = vmatmul.mubr.f32.gmra.mxu0 %v689
    %v756 = vpop.f32.mrf.mxu0
    %v757 = vadd.f32 0.001, %v756
    %v758 = vpop.f32.mrf.mxu0
    %759 = vdwg.mxu0
    %v760 = vrsqrt.pop %v757
    %v762 = vsel %vm223, %v760, 0
    %764 = vmatprep.subr.mxu0 0.0
    %765 = vmatpush1.msra.mxu0 0.0
    %766 = vmatprep.subr.mxu0 0.0
    %767 = vmatpush1.msra.mxu0 0.0
    %768 = vmatprep.subr.mxu0 0.0
    %769 = vmatpush1.msra.mxu0 0.0
    %770 = vmatprep.subr.mxu0 0.0
    %771 = vmatpush1.msra.mxu0 0.0
    %772 = vmatprep.subr.mxu0 0.0
    %773 = vmatpush1.msra.mxu0 0.0
    %774 = vmatprep.subr.mxu0 0.0
    %775 = vmatpush1.msra.mxu0 0.0
    %776 = vmatprep.subr.mxu0 0.0
    %777 = vmatpush1.msra.mxu0 0.0
    %778 = vmatprep.subr.mxu0 0.0
    %779 = vmatpush1.msra.mxu0 0.0
    %780 = vmatprep.subr.mxu0 0.0
    %781 = vmatpush1.msra.mxu0 0.0
    %782 = vmatprep.subr.mxu0 0.0
    %783 = vmatpush1.msra.mxu0 0.0
    %784 = vmatprep.subr.mxu0 0.0
    %785 = vmatpush1.msra.mxu0 0.0
    %786 = vmatprep.subr.mxu0 0.0
    %787 = vmatpush1.msra.mxu0 0.0
    %788 = vmatprep.subr.mxu0 0.0
    %789 = vmatpush1.msra.mxu0 0.0
    %790 = vmatprep.subr.mxu0 0.0
    %791 = vmatpush1.msra.mxu0 0.0
    %792 = vmatprep.subr.mxu0 0.0
    %793 = vmatpush1.msra.mxu0 0.0
    %794 = vmatprep.subr.mxu0 0.0
    %795 = vmatpush1.msra.mxu0 %v66
    %796 = vmatprep.subr.mxu0 0.0
    %797 = vmatpush2.msra.mxu0 0.0
    %798 = vmatprep.subr.mxu0 0.0
    %799 = vmatpush2.msra.mxu0 0.0
    %800 = vmatprep.subr.mxu0 0.0
    %801 = vmatpush2.msra.mxu0 0.0
    %802 = vmatprep.subr.mxu0 0.0
    %803 = vmatpush2.msra.mxu0 0.0
    %804 = vmatprep.subr.mxu0 0.0
    %805 = vmatpush2.msra.mxu0 0.0
    %806 = vmatprep.subr.mxu0 0.0
    %807 = vmatpush2.msra.mxu0 0.0
    %808 = vmatprep.subr.mxu0 0.0
    %809 = vmatpush2.msra.mxu0 0.0
    %810 = vmatprep.subr.mxu0 0.0
    %811 = vmatpush2.msra.mxu0 0.0
    %812 = vmatprep.subr.mxu0 0.0
    %813 = vmatpush2.msra.mxu0 0.0
    %814 = vmatprep.subr.mxu0 0.0
    %815 = vmatpush2.msra.mxu0 0.0
    %816 = vmatprep.subr.mxu0 0.0
    %817 = vmatpush2.msra.mxu0 0.0
    %818 = vmatprep.subr.mxu0 0.0
    %819 = vmatpush2.msra.mxu0 0.0
    %820 = vmatprep.subr.mxu0 0.0
    %821 = vmatpush2.msra.mxu0 0.0
    %822 = vmatprep.subr.mxu0 0.0
    %823 = vmatpush2.msra.mxu0 0.0
    %824 = vmatprep.subr.mxu0 0.0
    %825 = vmatpush2.msra.mxu0 0.0
    %826 = vmatprep.subr.mxu0 0.0
    %827 = vmatpush2.msra.mxu0 0.0
    %828 = vmatprep.mubr.f32.mxu0 0.0
    %829 = vmatmul.mubr.f32.gmra.mxu0 %v762
    %v830 = vpop.f32.mrf.mxu0
    %v831 = vadd.f32 0.0, %v830
    %v832 = vpop.f32.mrf.mxu0
    %833 = vdwg.mxu0
    %v834 = vmul.f32 %v688, %v831
    %v835 = vlaneseq
    %v836 = vshrl.u32 %v835, 7
    %v837 = vsub.s32 4, %v836
    %v838 = vrot.slane %v49, %v837
    %v839 = vmul.f32 %v834, %v838
    %v840 = vlaneseq
    %v841 = vshrl.u32 %v840, 7
    %v842 = vsub.s32 5, %v841
    %v843 = vrot.slane %v49, %v842
    %v844 = vadd.f32 %v839, %v843
    %v845 = vtanh.pop %v844
    %v846 = vld [vmem:[%s3] sm:$0xff]
    %v847 = vld [vmem:[%s3 + $0x8] sm:$0xff]
    %v848 = vld [vmem:[%s3 + $0x10] sm:$0xff]
    %v849 = vld [vmem:[%s3 + $0x18] sm:$0xff]
    %v850 = vld [vmem:[%s3 + $0x20] sm:$0xff]
    %v851 = vld [vmem:[%s3 + $0x28] sm:$0xff]
    %v852 = vld [vmem:[%s3 + $0x30] sm:$0xff]
    %v853 = vld [vmem:[%s3 + $0x38] sm:$0xff]
    %v854 = vld [vmem:[%s3 + $0x40] sm:$0xff]
    %v855 = vld [vmem:[%s3 + $0x48] sm:$0xff]
    %v856 = vld [vmem:[%s3 + $0x50] sm:$0xff]
    %v857 = vld [vmem:[%s3 + $0x58] sm:$0xff]
    %v858 = vld [vmem:[%s3 + $0x60] sm:$0xff]
    %v859 = vld [vmem:[%s3 + $0x68] sm:$0xff]
    %v860 = vld [vmem:[%s3 + $0x70] sm:$0xff]
    %v861 = vld [vmem:[%s3 + $0x78] sm:$0xff]
    %v862 = vlaneseq
    %v863 = vshrl.u32 %v862, 7
    %v864 = vsub.s32 6, %v863
    %v865 = vrot.slane %v49, %v864
    %866 = vmatprep.subr.mxu0 0.0
    %867 = vmatpush1.msra.mxu0 %v861
    %868 = vmatprep.subr.mxu0 0.0
    %869 = vmatpush1.msra.mxu0 %v860
    %870 = vmatprep.subr.mxu0 0.0
    %871 = vmatpush1.msra.mxu0 %v859
    %872 = vmatprep.subr.mxu0 0.0
    %873 = vmatpush1.msra.mxu0 %v858
    %874 = vmatprep.subr.mxu0 0.0
    %875 = vmatpush1.msra.mxu0 %v857
    %876 = vmatprep.subr.mxu0 0.0
    %877 = vmatpush1.msra.mxu0 %v856
    %878 = vmatprep.subr.mxu0 0.0
    %879 = vmatpush1.msra.mxu0 %v855
    %880 = vmatprep.subr.mxu0 0.0
    %881 = vmatpush1.msra.mxu0 %v854
    %882 = vmatprep.subr.mxu0 0.0
    %883 = vmatpush1.msra.mxu0 %v853
    %884 = vmatprep.subr.mxu0 0.0
    %885 = vmatpush1.msra.mxu0 %v852
    %886 = vmatprep.subr.mxu0 0.0
    %887 = vmatpush1.msra.mxu0 %v851
    %888 = vmatprep.subr.mxu0 0.0
    %889 = vmatpush1.msra.mxu0 %v850
    %890 = vmatprep.subr.mxu0 0.0
    %891 = vmatpush1.msra.mxu0 %v849
    %892 = vmatprep.subr.mxu0 0.0
    %893 = vmatpush1.msra.mxu0 %v848
    %894 = vmatprep.subr.mxu0 0.0
    %895 = vmatpush1.msra.mxu0 %v847
    %896 = vmatprep.subr.mxu0 0.0
    %897 = vmatpush1.msra.mxu0 %v846
    %898 = vmatprep.subr.mxu0 0.0
    %899 = vmatpush2.msra.mxu0 0.0
    %900 = vmatprep.subr.mxu0 0.0
    %901 = vmatpush2.msra.mxu0 0.0
    %902 = vmatprep.subr.mxu0 0.0
    %903 = vmatpush2.msra.mxu0 0.0
    %904 = vmatprep.subr.mxu0 0.0
    %905 = vmatpush2.msra.mxu0 0.0
    %906 = vmatprep.subr.mxu0 0.0
    %907 = vmatpush2.msra.mxu0 0.0
    %908 = vmatprep.subr.mxu0 0.0
    %909 = vmatpush2.msra.mxu0 0.0
    %910 = vmatprep.subr.mxu0 0.0
    %911 = vmatpush2.msra.mxu0 0.0
    %912 = vmatprep.subr.mxu0 0.0
    %913 = vmatpush2.msra.mxu0 0.0
    %914 = vmatprep.subr.mxu0 0.0
    %915 = vmatpush2.msra.mxu0 0.0
    %916 = vmatprep.subr.mxu0 0.0
    %917 = vmatpush2.msra.mxu0 0.0
    %918 = vmatprep.subr.mxu0 0.0
    %919 = vmatpush2.msra.mxu0 0.0
    %920 = vmatprep.subr.mxu0 0.0
    %921 = vmatpush2.msra.mxu0 0.0
    %922 = vmatprep.subr.mxu0 0.0
    %923 = vmatpush2.msra.mxu0 0.0
    %924 = vmatprep.subr.mxu0 0.0
    %925 = vmatpush2.msra.mxu0 0.0
    %926 = vmatprep.subr.mxu0 0.0
    %927 = vmatpush2.msra.mxu0 0.0
    %928 = vmatprep.subr.mxu0 0.0
    %929 = vmatpush2.msra.mxu0 0.0
    %930 = vmatprep.mubr.f32.mxu0 0.0
    %931 = vmatmul.mubr.f32.gmra.mxu0 %v845
    %v932 = vpop.f32.mrf.mxu0
    %v933 = vadd.f32 %v865, %v932
    %v934 = vpop.f32.mrf.mxu0
    %935 = vdwg.mxu0
    %936 = vmax.xlane.f32.xlu0 %v933
    %v937 = vpop.xlane.xlu0 %936
    %v938 = vsub.f32 %v933, %v937
    %v939 = vmul.f32 %v938, 1.442695
    %v940 = vpow.pop %v939
    %v941 = vld [vmem:[%s7] sm:$0xff]
    %v942 = vld [vmem:[%s7 + $0x8] sm:$0xff]
    %v943 = vld [vmem:[%s7 + $0x10] sm:$0xff]
    %v944 = vld [vmem:[%s7 + $0x18] sm:$0xff]
    %v945 = vld [vmem:[%s7 + $0x20] sm:$0xff]
    %v946 = vld [vmem:[%s7 + $0x28] sm:$0xff]
    %v947 = vld [vmem:[%s7 + $0x30] sm:$0xff]
    %v948 = vld [vmem:[%s7 + $0x38] sm:$0xff]
    %v949 = vld [vmem:[%s7 + $0x40] sm:$0xff]
    %v950 = vld [vmem:[%s7 + $0x48] sm:$0xff]
    %v951 = vld [vmem:[%s7 + $0x50] sm:$0xff]
    %v952 = vld [vmem:[%s7 + $0x58] sm:$0xff]
    %v953 = vld [vmem:[%s7 + $0x60] sm:$0xff]
    %v954 = vld [vmem:[%s7 + $0x68] sm:$0xff]
    %v955 = vld [vmem:[%s7 + $0x70] sm:$0xff]
    %v956 = vld [vmem:[%s7 + $0x78] sm:$0xff]
    %957 = vmatprep.subr.mxu0 0.0
    %958 = vmatpush1.msra.mxu0 %v956
    %959 = vmatprep.subr.mxu0 0.0
    %960 = vmatpush1.msra.mxu0 %v955
    %961 = vmatprep.subr.mxu0 0.0
    %962 = vmatpush1.msra.mxu0 %v954
    %963 = vmatprep.subr.mxu0 0.0
    %964 = vmatpush1.msra.mxu0 %v953
    %965 = vmatprep.subr.mxu0 0.0
    %966 = vmatpush1.msra.mxu0 %v952
    %967 = vmatprep.subr.mxu0 0.0
    %968 = vmatpush1.msra.mxu0 %v951
    %969 = vmatprep.subr.mxu0 0.0
    %970 = vmatpush1.msra.mxu0 %v950
    %971 = vmatprep.subr.mxu0 0.0
    %972 = vmatpush1.msra.mxu0 %v949
    %973 = vmatprep.subr.mxu0 0.0
    %974 = vmatpush1.msra.mxu0 %v948
    %975 = vmatprep.subr.mxu0 0.0
    %976 = vmatpush1.msra.mxu0 %v947
    %977 = vmatprep.subr.mxu0 0.0
    %978 = vmatpush1.msra.mxu0 %v946
    %979 = vmatprep.subr.mxu0 0.0
    %980 = vmatpush1.msra.mxu0 %v945
    %981 = vmatprep.subr.mxu0 0.0
    %982 = vmatpush1.msra.mxu0 %v944
    %983 = vmatprep.subr.mxu0 0.0
    %984 = vmatpush1.msra.mxu0 %v943
    %985 = vmatprep.subr.mxu0 0.0
    %986 = vmatpush1.msra.mxu0 %v942
    %987 = vmatprep.subr.mxu0 0.0
    %988 = vmatpush1.msra.mxu0 %v941
    %989 = vmatprep.subr.mxu0 0.0
    %990 = vmatpush2.msra.mxu0 0.0
    %991 = vmatprep.subr.mxu0 0.0
    %992 = vmatpush2.msra.mxu0 0.0
    %993 = vmatprep.subr.mxu0 0.0
    %994 = vmatpush2.msra.mxu0 0.0
    %995 = vmatprep.subr.mxu0 0.0
    %996 = vmatpush2.msra.mxu0 0.0
    %997 = vmatprep.subr.mxu0 0.0
    %998 = vmatpush2.msra.mxu0 0.0
    %999 = vmatprep.subr.mxu0 0.0
    %1000 = vmatpush2.msra.mxu0 0.0
    %1001 = vmatprep.subr.mxu0 0.0
    %1002 = vmatpush2.msra.mxu0 0.0
    %1003 = vmatprep.subr.mxu0 0.0
    %1004 = vmatpush2.msra.mxu0 0.0
    %1005 = vmatprep.subr.mxu0 0.0
    %1006 = vmatpush2.msra.mxu0 0.0
    %1007 = vmatprep.subr.mxu0 0.0
    %1008 = vmatpush2.msra.mxu0 0.0
    %1009 = vmatprep.subr.mxu0 0.0
    %1010 = vmatpush2.msra.mxu0 0.0
    %1011 = vmatprep.subr.mxu0 0.0
    %1012 = vmatpush2.msra.mxu0 0.0
    %1013 = vmatprep.subr.mxu0 0.0
    %1014 = vmatpush2.msra.mxu0 0.0
    %1015 = vmatprep.subr.mxu0 0.0
    %1016 = vmatpush2.msra.mxu0 0.0
    %1017 = vmatprep.subr.mxu0 0.0
    %1018 = vmatpush2.msra.mxu0 0.0
    %1019 = vmatprep.subr.mxu0 0.0
    %1020 = vmatpush2.msra.mxu0 0.0
    %1021 = vmatprep.mubr.f32.mxu0 0.0
    %1022 = vmatmul.mubr.f32.gmra.mxu0 %v940
    %v1023 = vpop.f32.mrf.mxu0
    %v1024 = vadd.f32 0.0, %v1023
    %v1025 = vpop.f32.mrf.mxu0
    %1026 = vdwg.mxu0
    %v1027 = vrcp.pop %v1024
    %v1028 = vld [vmem:[%s9] sm:$0xff]
    %v1029 = vld [vmem:[%s9 + $0x8] sm:$0xff]
    %v1030 = vld [vmem:[%s9 + $0x10] sm:$0xff]
    %v1031 = vld [vmem:[%s9 + $0x18] sm:$0xff]
    %v1032 = vld [vmem:[%s9 + $0x20] sm:$0xff]
    %v1033 = vld [vmem:[%s9 + $0x28] sm:$0xff]
    %v1034 = vld [vmem:[%s9 + $0x30] sm:$0xff]
    %v1035 = vld [vmem:[%s9 + $0x38] sm:$0xff]
    %v1036 = vld [vmem:[%s9 + $0x40] sm:$0xff]
    %v1037 = vld [vmem:[%s9 + $0x48] sm:$0xff]
    %v1038 = vld [vmem:[%s9 + $0x50] sm:$0xff]
    %v1039 = vld [vmem:[%s9 + $0x58] sm:$0xff]
    %v1040 = vld [vmem:[%s9 + $0x60] sm:$0xff]
    %v1041 = vld [vmem:[%s9 + $0x68] sm:$0xff]
    %v1042 = vld [vmem:[%s9 + $0x70] sm:$0xff]
    %v1043 = vld [vmem:[%s9 + $0x78] sm:$0xff]
    %1044 = vmatprep.subr.mxu0 0.0
    %1045 = vmatpush1.msra.mxu0 %v1043
    %1046 = vmatprep.subr.mxu0 0.0
    %1047 = vmatpush1.msra.mxu0 %v1042
    %1048 = vmatprep.subr.mxu0 0.0
    %1049 = vmatpush1.msra.mxu0 %v1041
    %1050 = vmatprep.subr.mxu0 0.0
    %1051 = vmatpush1.msra.mxu0 %v1040
    %1052 = vmatprep.subr.mxu0 0.0
    %1053 = vmatpush1.msra.mxu0 %v1039
    %1054 = vmatprep.subr.mxu0 0.0
    %1055 = vmatpush1.msra.mxu0 %v1038
    %1056 = vmatprep.subr.mxu0 0.0
    %1057 = vmatpush1.msra.mxu0 %v1037
    %1058 = vmatprep.subr.mxu0 0.0
    %1059 = vmatpush1.msra.mxu0 %v1036
    %1060 = vmatprep.subr.mxu0 0.0
    %1061 = vmatpush1.msra.mxu0 %v1035
    %1062 = vmatprep.subr.mxu0 0.0
    %1063 = vmatpush1.msra.mxu0 %v1034
    %1064 = vmatprep.subr.mxu0 0.0
    %1065 = vmatpush1.msra.mxu0 %v1033
    %1066 = vmatprep.subr.mxu0 0.0
    %1067 = vmatpush1.msra.mxu0 %v1032
    %1068 = vmatprep.subr.mxu0 0.0
    %1069 = vmatpush1.msra.mxu0 %v1031
    %1070 = vmatprep.subr.mxu0 0.0
    %1071 = vmatpush1.msra.mxu0 %v1030
    %1072 = vmatprep.subr.mxu0 0.0
    %1073 = vmatpush1.msra.mxu0 %v1029
    %1074 = vmatprep.subr.mxu0 0.0
    %1075 = vmatpush1.msra.mxu0 %v1028
    %1076 = vmatprep.subr.mxu0 0.0
    %1077 = vmatpush2.msra.mxu0 0.0
    %1078 = vmatprep.subr.mxu0 0.0
    %1079 = vmatpush2.msra.mxu0 0.0
    %1080 = vmatprep.subr.mxu0 0.0
    %1081 = vmatpush2.msra.mxu0 0.0
    %1082 = vmatprep.subr.mxu0 0.0
    %1083 = vmatpush2.msra.mxu0 0.0
    %1084 = vmatprep.subr.mxu0 0.0
    %1085 = vmatpush2.msra.mxu0 0.0
    %1086 = vmatprep.subr.mxu0 0.0
    %1087 = vmatpush2.msra.mxu0 0.0
    %1088 = vmatprep.subr.mxu0 0.0
    %1089 = vmatpush2.msra.mxu0 0.0
    %1090 = vmatprep.subr.mxu0 0.0
    %1091 = vmatpush2.msra.mxu0 0.0
    %1092 = vmatprep.subr.mxu0 0.0
    %1093 = vmatpush2.msra.mxu0 0.0
    %1094 = vmatprep.subr.mxu0 0.0
    %1095 = vmatpush2.msra.mxu0 0.0
    %1096 = vmatprep.subr.mxu0 0.0
    %1097 = vmatpush2.msra.mxu0 0.0
    %1098 = vmatprep.subr.mxu0 0.0
    %1099 = vmatpush2.msra.mxu0 0.0
    %1100 = vmatprep.subr.mxu0 0.0
    %1101 = vmatpush2.msra.mxu0 0.0
    %1102 = vmatprep.subr.mxu0 0.0
    %1103 = vmatpush2.msra.mxu0 0.0
    %1104 = vmatprep.subr.mxu0 0.0
    %1105 = vmatpush2.msra.mxu0 0.0
    %1106 = vmatprep.subr.mxu0 0.0
    %1107 = vmatpush2.msra.mxu0 0.0
    %1108 = vmatprep.mubr.f32.mxu0 0.0
    %1109 = vmatmul.mubr.f32.gmra.mxu0 %v940
    %v1110 = vpop.f32.mrf.mxu0
    %v1111 = vadd.f32 0.0, %v1110
    %v1112 = vpop.f32.mrf.mxu0
    %1113 = vdwg.mxu0
    %v1114 = vld [vmem:[%s8] sm:$0xff]
    %v1115 = vld [vmem:[%s8 + $0x8] sm:$0xff]
    %vm1116 = vcmask 130048
    %v1118 = vsel %vm1116, %v1027, 0
    %1120 = vmatprep.subr.mxu0 0.0
    %1121 = vmatpush1.msra.mxu0 0.0
    %1122 = vmatprep.subr.mxu0 0.0
    %1123 = vmatpush1.msra.mxu0 0.0
    %1124 = vmatprep.subr.mxu0 0.0
    %1125 = vmatpush1.msra.mxu0 0.0
    %1126 = vmatprep.subr.mxu0 0.0
    %1127 = vmatpush1.msra.mxu0 0.0
    %1128 = vmatprep.subr.mxu0 0.0
    %1129 = vmatpush1.msra.mxu0 0.0
    %1130 = vmatprep.subr.mxu0 0.0
    %1131 = vmatpush1.msra.mxu0 0.0
    %1132 = vmatprep.subr.mxu0 0.0
    %1133 = vmatpush1.msra.mxu0 0.0
    %1134 = vmatprep.subr.mxu0 0.0
    %1135 = vmatpush1.msra.mxu0 0.0
    %1136 = vmatprep.subr.mxu0 0.0
    %1137 = vmatpush1.msra.mxu0 0.0
    %1138 = vmatprep.subr.mxu0 0.0
    %1139 = vmatpush1.msra.mxu0 0.0
    %1140 = vmatprep.subr.mxu0 0.0
    %1141 = vmatpush1.msra.mxu0 0.0
    %1142 = vmatprep.subr.mxu0 0.0
    %1143 = vmatpush1.msra.mxu0 0.0
    %1144 = vmatprep.subr.mxu0 0.0
    %1145 = vmatpush1.msra.mxu0 0.0
    %1146 = vmatprep.subr.mxu0 0.0
    %1147 = vmatpush1.msra.mxu0 0.0
    %1148 = vmatprep.subr.mxu0 0.0
    %1149 = vmatpush1.msra.mxu0 %v1115
    %1150 = vmatprep.subr.mxu0 0.0
    %1151 = vmatpush1.msra.mxu0 %v1114
    %1152 = vmatprep.subr.mxu0 0.0
    %1153 = vmatpush2.msra.mxu0 0.0
    %1154 = vmatprep.subr.mxu0 0.0
    %1155 = vmatpush2.msra.mxu0 0.0
    %1156 = vmatprep.subr.mxu0 0.0
    %1157 = vmatpush2.msra.mxu0 0.0
    %1158 = vmatprep.subr.mxu0 0.0
    %1159 = vmatpush2.msra.mxu0 0.0
    %1160 = vmatprep.subr.mxu0 0.0
    %1161 = vmatpush2.msra.mxu0 0.0
    %1162 = vmatprep.subr.mxu0 0.0
    %1163 = vmatpush2.msra.mxu0 0.0
    %1164 = vmatprep.subr.mxu0 0.0
    %1165 = vmatpush2.msra.mxu0 0.0
    %1166 = vmatprep.subr.mxu0 0.0
    %1167 = vmatpush2.msra.mxu0 0.0
    %1168 = vmatprep.subr.mxu0 0.0
    %1169 = vmatpush2.msra.mxu0 0.0
    %1170 = vmatprep.subr.mxu0 0.0
    %1171 = vmatpush2.msra.mxu0 0.0
    %1172 = vmatprep.subr.mxu0 0.0
    %1173 = vmatpush2.msra.mxu0 0.0
    %1174 = vmatprep.subr.mxu0 0.0
    %1175 = vmatpush2.msra.mxu0 0.0
    %1176 = vmatprep.subr.mxu0 0.0
    %1177 = vmatpush2.msra.mxu0 0.0
    %1178 = vmatprep.subr.mxu0 0.0
    %1179 = vmatpush2.msra.mxu0 0.0
    %1180 = vmatprep.subr.mxu0 0.0
    %1181 = vmatpush2.msra.mxu0 0.0
    %1182 = vmatprep.subr.mxu0 0.0
    %1183 = vmatpush2.msra.mxu0 0.0
    %1184 = vmatprep.mubr.f32.mxu0 0.0
    %1185 = vmatmul.mubr.f32.gmra.mxu0 %v1118
    %v1186 = vpop.f32.mrf.mxu0
    %v1187 = vadd.f32 0.0, %v1186
    %v1188 = vpop.f32.mrf.mxu0
    %1189 = vdwg.mxu0
    %v1190 = vmul.f32 %v1111, %v1187
    %v1191 = vmul.f32 %v933, 0.5
    %v1192 = vtanh.pop %v1191
    %v1193 = vadd.f32 %v1192, 1.0
    %v1194 = vmul.f32 %v1193, 0.5
    %v1195 = vld [vmem:[%s10] sm:$0xff]
    %v1196 = vld [vmem:[%s10 + $0x8] sm:$0xff]
    %v1197 = vld [vmem:[%s10 + $0x10] sm:$0xff]
    %v1198 = vld [vmem:[%s10 + $0x18] sm:$0xff]
    %v1199 = vld [vmem:[%s10 + $0x20] sm:$0xff]
    %v1200 = vld [vmem:[%s10 + $0x28] sm:$0xff]
    %v1201 = vld [vmem:[%s10 + $0x30] sm:$0xff]
    %v1202 = vld [vmem:[%s10 + $0x38] sm:$0xff]
    %v1203 = vld [vmem:[%s10 + $0x40] sm:$0xff]
    %v1204 = vld [vmem:[%s10 + $0x48] sm:$0xff]
    %v1205 = vld [vmem:[%s10 + $0x50] sm:$0xff]
    %v1206 = vld [vmem:[%s10 + $0x58] sm:$0xff]
    %v1207 = vld [vmem:[%s10 + $0x60] sm:$0xff]
    %v1208 = vld [vmem:[%s10 + $0x68] sm:$0xff]
    %v1209 = vld [vmem:[%s10 + $0x70] sm:$0xff]
    %v1210 = vld [vmem:[%s10 + $0x78] sm:$0xff]
    %1211 = vmatprep.subr.mxu0 0.0
    %1212 = vmatpush1.msra.mxu0 %v1210
    %1213 = vmatprep.subr.mxu0 0.0
    %1214 = vmatpush1.msra.mxu0 %v1209
    %1215 = vmatprep.subr.mxu0 0.0
    %1216 = vmatpush1.msra.mxu0 %v1208
    %1217 = vmatprep.subr.mxu0 0.0
    %1218 = vmatpush1.msra.mxu0 %v1207
    %1219 = vmatprep.subr.mxu0 0.0
    %1220 = vmatpush1.msra.mxu0 %v1206
    %1221 = vmatprep.subr.mxu0 0.0
    %1222 = vmatpush1.msra.mxu0 %v1205
    %1223 = vmatprep.subr.mxu0 0.0
    %1224 = vmatpush1.msra.mxu0 %v1204
    %1225 = vmatprep.subr.mxu0 0.0
    %1226 = vmatpush1.msra.mxu0 %v1203
    %1227 = vmatprep.subr.mxu0 0.0
    %1228 = vmatpush1.msra.mxu0 %v1202
    %1229 = vmatprep.subr.mxu0 0.0
    %1230 = vmatpush1.msra.mxu0 %v1201
    %1231 = vmatprep.subr.mxu0 0.0
    %1232 = vmatpush1.msra.mxu0 %v1200
    %1233 = vmatprep.subr.mxu0 0.0
    %1234 = vmatpush1.msra.mxu0 %v1199
    %1235 = vmatprep.subr.mxu0 0.0
    %1236 = vmatpush1.msra.mxu0 %v1198
    %1237 = vmatprep.subr.mxu0 0.0
    %1238 = vmatpush1.msra.mxu0 %v1197
    %1239 = vmatprep.subr.mxu0 0.0
    %1240 = vmatpush1.msra.mxu0 %v1196
    %1241 = vmatprep.subr.mxu0 0.0
    %1242 = vmatpush1.msra.mxu0 %v1195
    %1243 = vmatprep.subr.mxu0 0.0
    %1244 = vmatpush2.msra.mxu0 0.0
    %1245 = vmatprep.subr.mxu0 0.0
    %1246 = vmatpush2.msra.mxu0 0.0
    %1247 = vmatprep.subr.mxu0 0.0
    %1248 = vmatpush2.msra.mxu0 0.0
    %1249 = vmatprep.subr.mxu0 0.0
    %1250 = vmatpush2.msra.mxu0 0.0
    %1251 = vmatprep.subr.mxu0 0.0
    %1252 = vmatpush2.msra.mxu0 0.0
    %1253 = vmatprep.subr.mxu0 0.0
    %1254 = vmatpush2.msra.mxu0 0.0
    %1255 = vmatprep.subr.mxu0 0.0
    %1256 = vmatpush2.msra.mxu0 0.0
    %1257 = vmatprep.subr.mxu0 0.0
    %1258 = vmatpush2.msra.mxu0 0.0
    %1259 = vmatprep.subr.mxu0 0.0
    %1260 = vmatpush2.msra.mxu0 0.0
    %1261 = vmatprep.subr.mxu0 0.0
    %1262 = vmatpush2.msra.mxu0 0.0
    %1263 = vmatprep.subr.mxu0 0.0
    %1264 = vmatpush2.msra.mxu0 0.0
    %1265 = vmatprep.subr.mxu0 0.0
    %1266 = vmatpush2.msra.mxu0 0.0
    %1267 = vmatprep.subr.mxu0 0.0
    %1268 = vmatpush2.msra.mxu0 0.0
    %1269 = vmatprep.subr.mxu0 0.0
    %1270 = vmatpush2.msra.mxu0 0.0
    %1271 = vmatprep.subr.mxu0 0.0
    %1272 = vmatpush2.msra.mxu0 0.0
    %1273 = vmatprep.subr.mxu0 0.0
    %1274 = vmatpush2.msra.mxu0 0.0
    %1275 = vmatprep.mubr.f32.mxu0 0.0
    %1276 = vmatmul.mubr.f32.gmra.mxu0 %v1194
    %v1277 = vpop.f32.mrf.mxu0
    %v1278 = vadd.f32 0.0, %v1277
    %v1279 = vpop.f32.mrf.mxu0
    %1280 = vdwg.mxu0
    %v1281 = vmul.f32 %v1190, %v48
    %v1282 = vld [vmem:[%s11] sm:$0xff]
    %v1283 = vld [vmem:[%s11 + $0x8] sm:$0xff]
    %v1284 = vld [vmem:[%s11 + $0x10] sm:$0xff]
    %v1285 = vld [vmem:[%s11 + $0x18] sm:$0xff]
    %v1286 = vld [vmem:[%s11 + $0x20] sm:$0xff]
    %v1287 = vld [vmem:[%s11 + $0x28] sm:$0xff]
    %v1288 = vld [vmem:[%s11 + $0x30] sm:$0xff]
    %v1289 = vld [vmem:[%s11 + $0x38] sm:$0xff]
    %v1291 = vsel %vm79, %v1281, 0
    %1293 = vmatprep.subr.mxu0 0.0
    %1294 = vmatpush1.msra.mxu0 0.0
    %1295 = vmatprep.subr.mxu0 0.0
    %1296 = vmatpush1.msra.mxu0 0.0
    %1297 = vmatprep.subr.mxu0 0.0
    %1298 = vmatpush1.msra.mxu0 0.0
    %1299 = vmatprep.subr.mxu0 0.0
    %1300 = vmatpush1.msra.mxu0 0.0
    %1301 = vmatprep.subr.mxu0 0.0
    %1302 = vmatpush1.msra.mxu0 0.0
    %1303 = vmatprep.subr.mxu0 0.0
    %1304 = vmatpush1.msra.mxu0 0.0
    %1305 = vmatprep.subr.mxu0 0.0
    %1306 = vmatpush1.msra.mxu0 0.0
    %1307 = vmatprep.subr.mxu0 0.0
    %1308 = vmatpush1.msra.mxu0 0.0
    %1309 = vmatprep.subr.mxu0 0.0
    %1310 = vmatpush1.msra.mxu0 %v1289
    %1311 = vmatprep.subr.mxu0 0.0
    %1312 = vmatpush1.msra.mxu0 %v1288
    %1313 = vmatprep.subr.mxu0 0.0
    %1314 = vmatpush1.msra.mxu0 %v1287
    %1315 = vmatprep.subr.mxu0 0.0
    %1316 = vmatpush1.msra.mxu0 %v1286
    %1317 = vmatprep.subr.mxu0 0.0
    %1318 = vmatpush1.msra.mxu0 %v1285
    %1319 = vmatprep.subr.mxu0 0.0
    %1320 = vmatpush1.msra.mxu0 %v1284
    %1321 = vmatprep.subr.mxu0 0.0
    %1322 = vmatpush1.msra.mxu0 %v1283
    %1323 = vmatprep.subr.mxu0 0.0
    %1324 = vmatpush1.msra.mxu0 %v1282
    %1325 = vmatprep.subr.mxu0 0.0
    %1326 = vmatpush2.msra.mxu0 0.0
    %1327 = vmatprep.subr.mxu0 0.0
    %1328 = vmatpush2.msra.mxu0 0.0
    %1329 = vmatprep.subr.mxu0 0.0
    %1330 = vmatpush2.msra.mxu0 0.0
    %1331 = vmatprep.subr.mxu0 0.0
    %1332 = vmatpush2.msra.mxu0 0.0
    %1333 = vmatprep.subr.mxu0 0.0
    %1334 = vmatpush2.msra.mxu0 0.0
    %1335 = vmatprep.subr.mxu0 0.0
    %1336 = vmatpush2.msra.mxu0 0.0
    %1337 = vmatprep.subr.mxu0 0.0
    %1338 = vmatpush2.msra.mxu0 0.0
    %1339 = vmatprep.subr.mxu0 0.0
    %1340 = vmatpush2.msra.mxu0 0.0
    %1341 = vmatprep.subr.mxu0 0.0
    %1342 = vmatpush2.msra.mxu0 0.0
    %1343 = vmatprep.subr.mxu0 0.0
    %1344 = vmatpush2.msra.mxu0 0.0
    %1345 = vmatprep.subr.mxu0 0.0
    %1346 = vmatpush2.msra.mxu0 0.0
    %1347 = vmatprep.subr.mxu0 0.0
    %1348 = vmatpush2.msra.mxu0 0.0
    %1349 = vmatprep.subr.mxu0 0.0
    %1350 = vmatpush2.msra.mxu0 0.0
    %1351 = vmatprep.subr.mxu0 0.0
    %1352 = vmatpush2.msra.mxu0 0.0
    %1353 = vmatprep.subr.mxu0 0.0
    %1354 = vmatpush2.msra.mxu0 0.0
    %1355 = vmatprep.subr.mxu0 0.0
    %1356 = vmatpush2.msra.mxu0 0.0
    %1357 = vmatprep.mubr.f32.mxu0 0.0
    %1358 = vmatmul.mubr.f32.gmra.mxu0 %v1291
    %v1359 = vpop.f32.mrf.mxu0
    %v1360 = vadd.f32 0.0, %v1359
    %v1361 = vpop.f32.mrf.mxu0
    %1362 = vdwg.mxu0
    %v1363 = vmul.f32 %v1278, %v1360
    %v1364 = vld [vmem:[%s12] sm:$0xff]
    %v1365 = vld [vmem:[%s12 + $0x8] sm:$0xff]
    %v1366 = vld [vmem:[%s12 + $0x10] sm:$0xff]
    %v1367 = vld [vmem:[%s12 + $0x18] sm:$0xff]
    %v1368 = vld [vmem:[%s12 + $0x20] sm:$0xff]
    %v1369 = vld [vmem:[%s12 + $0x28] sm:$0xff]
    %v1370 = vld [vmem:[%s12 + $0x30] sm:$0xff]
    %v1371 = vld [vmem:[%s12 + $0x38] sm:$0xff]
    %v1372 = vld [vmem:[%s13] sm:$0xff]
    %v1374 = vsel %vm223, %v1363, 0
    %1376 = vmatprep.subr.mxu0 0.0
    %1377 = vmatpush1.msra.mxu0 0.0
    %1378 = vmatprep.subr.mxu0 0.0
    %1379 = vmatpush1.msra.mxu0 0.0
    %1380 = vmatprep.subr.mxu0 0.0
    %1381 = vmatpush1.msra.mxu0 0.0
    %1382 = vmatprep.subr.mxu0 0.0
    %1383 = vmatpush1.msra.mxu0 0.0
    %1384 = vmatprep.subr.mxu0 0.0
    %1385 = vmatpush1.msra.mxu0 0.0
    %1386 = vmatprep.subr.mxu0 0.0
    %1387 = vmatpush1.msra.mxu0 0.0
    %1388 = vmatprep.subr.mxu0 0.0
    %1389 = vmatpush1.msra.mxu0 0.0
    %1390 = vmatprep.subr.mxu0 0.0
    %1391 = vmatpush1.msra.mxu0 0.0
    %1392 = vmatprep.subr.mxu0 0.0
    %1393 = vmatpush1.msra.mxu0 0.0
    %1394 = vmatprep.subr.mxu0 0.0
    %1395 = vmatpush1.msra.mxu0 0.0
    %1396 = vmatprep.subr.mxu0 0.0
    %1397 = vmatpush1.msra.mxu0 0.0
    %1398 = vmatprep.subr.mxu0 0.0
    %1399 = vmatpush1.msra.mxu0 0.0
    %1400 = vmatprep.subr.mxu0 0.0
    %1401 = vmatpush1.msra.mxu0 0.0
    %1402 = vmatprep.subr.mxu0 0.0
    %1403 = vmatpush1.msra.mxu0 0.0
    %1404 = vmatprep.subr.mxu0 0.0
    %1405 = vmatpush1.msra.mxu0 0.0
    %1406 = vmatprep.subr.mxu0 0.0
    %1407 = vmatpush1.msra.mxu0 %v1372
    %1408 = vmatprep.subr.mxu0 0.0
    %1409 = vmatpush2.msra.mxu0 0.0
    %1410 = vmatprep.subr.mxu0 0.0
    %1411 = vmatpush2.msra.mxu0 0.0
    %1412 = vmatprep.subr.mxu0 0.0
    %1413 = vmatpush2.msra.mxu0 0.0
    %1414 = vmatprep.subr.mxu0 0.0
    %1415 = vmatpush2.msra.mxu0 0.0
    %1416 = vmatprep.subr.mxu0 0.0
    %1417 = vmatpush2.msra.mxu0 0.0
    %1418 = vmatprep.subr.mxu0 0.0
    %1419 = vmatpush2.msra.mxu0 0.0
    %1420 = vmatprep.subr.mxu0 0.0
    %1421 = vmatpush2.msra.mxu0 0.0
    %1422 = vmatprep.subr.mxu0 0.0
    %1423 = vmatpush2.msra.mxu0 0.0
    %1424 = vmatprep.subr.mxu0 0.0
    %1425 = vmatpush2.msra.mxu0 0.0
    %1426 = vmatprep.subr.mxu0 0.0
    %1427 = vmatpush2.msra.mxu0 0.0
    %1428 = vmatprep.subr.mxu0 0.0
    %1429 = vmatpush2.msra.mxu0 0.0
    %1430 = vmatprep.subr.mxu0 0.0
    %1431 = vmatpush2.msra.mxu0 0.0
    %1432 = vmatprep.subr.mxu0 0.0
    %1433 = vmatpush2.msra.mxu0 0.0
    %1434 = vmatprep.subr.mxu0 0.0
    %1435 = vmatpush2.msra.mxu0 0.0
    %1436 = vmatprep.subr.mxu0 0.0
    %1437 = vmatpush2.msra.mxu0 0.0
    %1438 = vmatprep.subr.mxu0 0.0
    %1439 = vmatpush2.msra.mxu0 0.0
    %1440 = vmatprep.mubr.f32.mxu0 0.0
    %1441 = vmatmul.mubr.f32.gmra.mxu0 %v1374
    %v1442 = vpop.f32.mrf.mxu0
    %v1443 = vadd.f32 0.0, %v1442
    %v1444 = vpop.f32.mrf.mxu0
    %1445 = vdwg.mxu0
    %v1447 = vsel %vm79, %v1190, 0
    %1449 = vmatprep.subr.mxu0 0.0
    %1450 = vmatpush1.msra.mxu0 0.0
    %1451 = vmatprep.subr.mxu0 0.0
    %1452 = vmatpush1.msra.mxu0 0.0
    %1453 = vmatprep.subr.mxu0 0.0
    %1454 = vmatpush1.msra.mxu0 0.0
    %1455 = vmatprep.subr.mxu0 0.0
    %1456 = vmatpush1.msra.mxu0 0.0
    %1457 = vmatprep.subr.mxu0 0.0
    %1458 = vmatpush1.msra.mxu0 0.0
    %1459 = vmatprep.subr.mxu0 0.0
    %1460 = vmatpush1.msra.mxu0 0.0
    %1461 = vmatprep.subr.mxu0 0.0
    %1462 = vmatpush1.msra.mxu0 0.0
    %1463 = vmatprep.subr.mxu0 0.0
    %1464 = vmatpush1.msra.mxu0 0.0
    %1465 = vmatprep.subr.mxu0 0.0
    %1466 = vmatpush1.msra.mxu0 %v1371
    %1467 = vmatprep.subr.mxu0 0.0
    %1468 = vmatpush1.msra.mxu0 %v1370
    %1469 = vmatprep.subr.mxu0 0.0
    %1470 = vmatpush1.msra.mxu0 %v1369
    %1471 = vmatprep.subr.mxu0 0.0
    %1472 = vmatpush1.msra.mxu0 %v1368
    %1473 = vmatprep.subr.mxu0 0.0
    %1474 = vmatpush1.msra.mxu0 %v1367
    %1475 = vmatprep.subr.mxu0 0.0
    %1476 = vmatpush1.msra.mxu0 %v1366
    %1477 = vmatprep.subr.mxu0 0.0
    %1478 = vmatpush1.msra.mxu0 %v1365
    %1479 = vmatprep.subr.mxu0 0.0
    %1480 = vmatpush1.msra.mxu0 %v1364
    %1481 = vmatprep.subr.mxu0 0.0
    %1482 = vmatpush2.msra.mxu0 0.0
    %1483 = vmatprep.subr.mxu0 0.0
    %1484 = vmatpush2.msra.mxu0 0.0
    %1485 = vmatprep.subr.mxu0 0.0
    %1486 = vmatpush2.msra.mxu0 0.0
    %1487 = vmatprep.subr.mxu0 0.0
    %1488 = vmatpush2.msra.mxu0 0.0
    %1489 = vmatprep.subr.mxu0 0.0
    %1490 = vmatpush2.msra.mxu0 0.0
    %1491 = vmatprep.subr.mxu0 0.0
    %1492 = vmatpush2.msra.mxu0 0.0
    %1493 = vmatprep.subr.mxu0 0.0
    %1494 = vmatpush2.msra.mxu0 0.0
    %1495 = vmatprep.subr.mxu0 0.0
    %1496 = vmatpush2.msra.mxu0 0.0
    %1497 = vmatprep.subr.mxu0 0.0
    %1498 = vmatpush2.msra.mxu0 0.0
    %1499 = vmatprep.subr.mxu0 0.0
    %1500 = vmatpush2.msra.mxu0 0.0
    %1501 = vmatprep.subr.mxu0 0.0
    %1502 = vmatpush2.msra.mxu0 0.0
    %1503 = vmatprep.subr.mxu0 0.0
    %1504 = vmatpush2.msra.mxu0 0.0
    %1505 = vmatprep.subr.mxu0 0.0
    %1506 = vmatpush2.msra.mxu0 0.0
    %1507 = vmatprep.subr.mxu0 0.0
    %1508 = vmatpush2.msra.mxu0 0.0
    %1509 = vmatprep.subr.mxu0 0.0
    %1510 = vmatpush2.msra.mxu0 0.0
    %1511 = vmatprep.subr.mxu0 0.0
    %1512 = vmatpush2.msra.mxu0 0.0
    %1513 = vmatprep.mubr.f32.mxu0 0.0
    %1514 = vmatmul.mubr.f32.gmra.mxu0 %v1447
    %v1515 = vpop.f32.mrf.mxu0
    %v1516 = vadd.f32 %v1443, %v1515
    %v1517 = vpop.f32.mrf.mxu0
    %1518 = vdwg.mxu0
    %vm1519 = vcmask 588800
    %1520 = vst.msk [vmem:[#allocation2] sm:$0xff] %vm1519, %v1516
    // Predicated region
    $region58: #{tpu_custom_call.1} parent=1 // pred_check
      _
    $region59: #{tpu_custom_call.1} parent=1 // pred_check_branch
      %1522 = sbr.rel (0) target = $region61
    $region60: #{tpu_custom_call.1} parent=1 // pred_region
      %s1524 = ssub.s32 128, 128
      %1525 = vsyncadd [#allocation3], %s1524
      %s1527 = sshll.u32 [#allocation2], 4
      %s1528 = int_to_ptr.vmem [resolvable:$true] %s1527
      %1530 = dma.vmem_to_hbm [thread:$0]  %s1528, 128, %s14, [#allocation3]
    $region61: #{tpu_custom_call.1} parent=1 // pred_fallthru
      _
    // Predicated region
    $region62: #{tpu_custom_call.1} parent=1 // pred_check
      _
    $region63: #{tpu_custom_call.1} parent=1 // pred_check_branch
      %1532 = sbr.rel (0) target = $region65
    $region64: #{tpu_custom_call.1} parent=1 // pred_region
      %1533 = dma.done [#allocation3], 128
    $region65: #{tpu_custom_call.1} parent=1 // pred_fallthru
      _
    %1534 = vsyncpa [#allocation3], 1

</llo_original>
